<compile_context>
chip_gen: v6e
topology: v6e:2x2x1
jax: 0.10.0
libtpu: 0.0.40
codegen_flags: <defaults>
</compile_context>

<pallas_src>
import jax
import jax.numpy as jnp
from jax import lax
from jax.experimental import pallas as pl
from jax.experimental.pallas import tpu as pltpu


# ----------------------------------------------------------------------------
# Small helpers.
# ----------------------------------------------------------------------------
def _round_up(x, m):
    return ((x + m - 1) // m) * m


def _largest_divisor_leq(n, cap):
    cap = max(1, min(cap, n))
    for d in range(cap, 0, -1):
        if n % d == 0:
            return d
    return 1


def _pick_batch_block(B):
    """Batch rows per grid block.  Aim for >= 2 blocks (v7x megacore) when B is
    large enough, keeping blocks sublane-aligned (multiple of 8) if possible."""
    if B < 16:
        return B
    target = max(8, B // 2)
    d = (target // 8) * 8
    while d >= 8:
        if B % d == 0:
            return d
        d -= 8
    return B


def _pick_time_block(T, b_blk, E, H, vmem_budget_bytes=8 << 20):
    """Timesteps per grid block: VMEM-budget aware, capped at 32 so the inner
    recurrence is always fully unrolled."""
    # Per-timestep f32 VMEM: double-buffered x and y blocks + gx scratch.
    per_t = b_blk * (2 * E + 2 * H + 4 * H) * 4
    cap = max(1, vmem_budget_bytes // max(per_t, 1))
    return _largest_divisor_leq(T, min(32, cap))


# ----------------------------------------------------------------------------
# Fused LSTM layer kernel (time-major).
#   x      : (T, B, E)   layer input
#   W_ih^T : (E, 4H), W_hh^T : (H, 4H), bias : (1, 4H)   (gate cols [i,f,o,g])
#   y      : (T, B, H)   hidden state per step
# Grid = (batch blocks 'parallel', time blocks 'arbitrary').  Per grid step:
# one block-wide MXU matmul produces gx into VMEM scratch, then a fully
# unrolled register-carried recurrence does only h @ W_hh^T + gate math.
# ----------------------------------------------------------------------------
def _lstm_fused_kernel(x_ref, wih_ref, whh_ref, bias_ref, h0_ref, c0_ref,
                       y_ref, hN_ref, cN_ref, h_sc, c_sc, gx_sc):
    t_idx = pl.program_id(1)
    t_blk, b_blk, E = x_ref.shape
    H = h_sc.shape[-1]

    @pl.when(t_idx == 0)
    def _init():
        h_sc[...] = h0_ref[...]
        c_sc[...] = c0_ref[...]

    # Hoisted input projection for the whole time block: one MXU matmul that
    # is NOT on the serial per-timestep critical path.
    x_flat = x_ref[...].reshape(t_blk * b_blk, E)
    gx = jnp.dot(x_flat, wih_ref[...], preferred_element_type=jnp.float32)
    gx_sc[...] = (gx + bias_ref[...]).reshape(t_blk, b_blk, 4 * H)

    whh = whh_ref[...]

    def step(tl, carry):
        h, c = carry
        gates = gx_sc[tl] + jnp.dot(h, whh, preferred_element_type=jnp.float32)
        # Gate columns pre-permuted to [i, f, o, g]: 2 EUP launches per step.
        sig = jax.nn.sigmoid(gates[:, :3 * H])
        g_g = jnp.tanh(gates[:, 3 * H:])
        c_new = sig[:, H:2 * H] * c + sig[:, :H] * g_g
        h_new = sig[:, 2 * H:3 * H] * jnp.tanh(c_new)
        y_ref[tl] = h_new.astype(y_ref.dtype)
        return h_new, c_new

    # h / c carried in registers across the (fully unrolled) time block.
    h_fin, c_fin = lax.fori_loop(0, t_blk, step, (h_sc[...], c_sc[...]),
                                 unroll=True)
    h_sc[...] = h_fin
    c_sc[...] = c_fin

    # Final state written once, on the last time block only.
    @pl.when(t_idx == pl.num_programs(1) - 1)
    def _finalize():
        hN_ref[...] = h_fin.astype(hN_ref.dtype)
        cN_ref[...] = c_fin.astype(cN_ref.dtype)


def lstm_layer(x_tb, w_ih_t, w_hh_t, bias, h0, c0, *, t_blk, b_blk):
    """x_tb: (T, B, E) -> (y (T, B, H), h_final (B, H), c_final (B, H))."""
    T, B, E = x_tb.shape
    H = h0.shape[-1]
    G = 4 * H
    grid = (B // b_blk, T // t_blk)

    grid_spec = pltpu.PrefetchScalarGridSpec(
        num_scalar_prefetch=0,
        grid=grid,
        in_specs=[
            pl.BlockSpec((t_blk, b_blk, E), lambda b, t: (t, b, 0)),   # x block
            pl.BlockSpec((E, G), lambda b, t: (0, 0)),                 # W_ih^T
            pl.BlockSpec((H, G), lambda b, t: (0, 0)),                 # W_hh^T
            pl.BlockSpec((1, G), lambda b, t: (0, 0)),                 # bias
            pl.BlockSpec((b_blk, H), lambda b, t: (b, 0)),             # h0
            pl.BlockSpec((b_blk, H), lambda b, t: (b, 0)),             # c0
        ],
        out_specs=[
            pl.BlockSpec((t_blk, b_blk, H), lambda b, t: (t, b, 0)),   # y block
            pl.BlockSpec((b_blk, H), lambda b, t: (b, 0)),             # h_final
            pl.BlockSpec((b_blk, H), lambda b, t: (b, 0)),             # c_final
        ],
        scratch_shapes=[
            pltpu.VMEM((b_blk, H), jnp.float32),          # h carry across blocks
            pltpu.VMEM((b_blk, H), jnp.float32),          # c carry across blocks
            pltpu.VMEM((t_blk, b_blk, G), jnp.float32),   # per-block gx
        ],
    )
    y, hN, cN = pl.pallas_call(
        _lstm_fused_kernel,
        grid_spec=grid_spec,
        out_shape=(
            jax.ShapeDtypeStruct((T, B, H), jnp.float32),
            jax.ShapeDtypeStruct((B, H), jnp.float32),
            jax.ShapeDtypeStruct((B, H), jnp.float32),
        ),
        compiler_params=pltpu.CompilerParams(
            dimension_semantics=("parallel", "arbitrary"),
            vmem_limit_bytes=32 * 1024 * 1024),
    )(x_tb, w_ih_t, w_hh_t, bias, h0, c0)
    return y, hN, cN


# ----------------------------------------------------------------------------
# Tiled matmul + bias (final FC).  x: (M, K), w: (K, N), b: (1, N) -> (M, N).
# Vocab (N) axis is the OUTER grid axis so the (K, bn) weight panel stays
# VMEM-resident while row blocks stream.  Inputs padded to block multiples.
# ----------------------------------------------------------------------------
def _matmul_bias_kernel(x_ref, w_ref, b_ref, o_ref):
    o_ref[...] = (jnp.dot(x_ref[...], w_ref[...],
                          preferred_element_type=jnp.float32)
                  + b_ref[...]).astype(o_ref.dtype)


def matmul_bias(x, w, b, *, bm=512, bn=512):
    M, K = x.shape
    _, N = w.shape
    bm = min(bm, _round_up(M, 8))
    bn = min(bn, _round_up(N, 128))
    Mp, Np = _round_up(M, bm), _round_up(N, bn)
    if Mp != M:
        x = jnp.pad(x, ((0, Mp - M), (0, 0)))
    if Np != N:
        w = jnp.pad(w, ((0, 0), (0, Np - N)))
        b = jnp.pad(b, ((0, 0), (0, Np - N)))
    out = pl.pallas_call(
        _matmul_bias_kernel,
        grid_spec=pltpu.PrefetchScalarGridSpec(
            num_scalar_prefetch=0,
            grid=(Np // bn, Mp // bm),          # N outer -> weight panel resident
            in_specs=[
                pl.BlockSpec((bm, K), lambda j, i: (i, 0)),
                pl.BlockSpec((K, bn), lambda j, i: (0, j)),
                pl.BlockSpec((1, bn), lambda j, i: (0, j)),
            ],
            out_specs=pl.BlockSpec((bm, bn), lambda j, i: (i, j)),
        ),
        out_shape=jax.ShapeDtypeStruct((Mp, Np), jnp.float32),
        compiler_params=pltpu.CompilerParams(
            dimension_semantics=("parallel", "parallel"),
            vmem_limit_bytes=32 * 1024 * 1024),
    )(x, w, b)
    return out[:M, :N]


# ----------------------------------------------------------------------------
# Full model forward.
# ----------------------------------------------------------------------------
@jax.jit
def lstm_model_forward(tokens, params, states):
    """tokens: (B, T) int32 -> (scores (B, T, V), new_states [(h, c)] of (B, H))."""
    B, T = tokens.shape
    # Embedding lookup (pure gather) stays in JAX glue; activations built
    # TIME-MAJOR so the recurrent kernel indexes the leading axis.
    x_tb = jnp.take(params["embed"], tokens.T, axis=0)          # (T, B, E)
    # dropout: identity (eval mode)
    E = x_tb.shape[-1]
    H = states[0][0].shape[-1]
    b_blk = _pick_batch_block(B)
    t_blk = _pick_time_block(T, b_blk, E, H)

    new_states = []
    for li, layer in enumerate(params["lstms"]):
        h0, c0 = states[li]
        x_tb, hN, cN = lstm_layer(x_tb, layer["w_ih_t"], layer["w_hh_t"],
                                  layer["bias"], h0, c0,
                                  t_blk=t_blk, b_blk=b_blk)
        new_states.append((hN, cN))
        # dropout: identity (eval mode)

    # Transpose BEFORE the FC (H-wide rows, not V-wide logits); the tiled FC
    # then emits scores directly in (B, T, V) order.
    x_bt = x_tb.transpose(1, 0, 2).reshape(B * T, H)
    scores = matmul_bias(x_bt, params["fc_w_t"], params["fc_b"]).reshape(B, T, -1)
    return scores, new_states


# ----------------------------------------------------------------------------
# Parameters.  Raw params use the PyTorch layout / gate order [i, f, g, o];
# prepare_params converts to the kernel layout (transposed, gate columns
# permuted to [i, f, o, g], b_ih + b_hh combined).
# ----------------------------------------------------------------------------
def init_raw_params(key, vocab_size, embed_dims, num_layers, init_range, bias=True):
    def u(k, shape):
        return jax.random.uniform(k, shape, jnp.float32, -init_range, init_range)

    E = embed_dims
    keys = jax.random.split(key, 3 + 4 * num_layers)
    raw = {"embed": u(keys[0], (vocab_size, E)),
           "fc_w": u(keys[1], (vocab_size, E)),
           "fc_b": u(keys[2], (vocab_size,)),
           "lstms": []}
    for l in range(num_layers):
        k0, k1, k2, k3 = keys[3 + 4 * l: 3 + 4 * (l + 1)]
        raw["lstms"].append({
            "w_ih": u(k0, (4 * E, E)),
            "w_hh": u(k1, (4 * E, E)),
            "b_ih": u(k2, (4 * E,)) if bias else jnp.zeros((4 * E,), jnp.float32),
            "b_hh": u(k3, (4 * E,)) if bias else jnp.zeros((4 * E,), jnp.float32),
        })
    return raw


def _permute_ifgo_to_ifog(w_t, H):
    """Permute gate-column blocks [i, f, g, o] -> [i, f, o, g]."""
    return jnp.concatenate(
        [w_t[:, :2 * H], w_t[:, 3 * H:4 * H], w_t[:, 2 * H:3 * H]], axis=1)


def prepare_params(raw):
    params = {"embed": raw["embed"],
              "fc_w_t": raw["fc_w"].T,                       # (E, V)
              "fc_b": raw["fc_b"].reshape(1, -1),            # (1, V)
              "lstms": []}
    for layer in raw["lstms"]:
        H = layer["w_hh"].shape[1]
        bias = (layer["b_ih"] + layer["b_hh"]).reshape(1, -1)
        params["lstms"].append({
            "w_ih_t": _permute_ifgo_to_ifog(layer["w_ih"].T, H),   # (E, 4H)
            "w_hh_t": _permute_ifgo_to_ifog(layer["w_hh"].T, H),   # (H, 4H)
            "bias":   _permute_ifgo_to_ifog(bias, H),              # (1, 4H)
        })
    return params


def init_state(batch_size, embed_dims, num_layers):
    z = jnp.zeros((batch_size, embed_dims), jnp.float32)
    return [(z, z) for _ in range(num_layers)]


# ----------------------------------------------------------------------------
# Pure-JAX reference (PyTorch gate order, batch-first) for validation.
# ----------------------------------------------------------------------------
def _reference_forward(tokens, raw, states):
    x = jnp.take(raw["embed"], tokens, axis=0)               # (B, T, E)
    new_states = []
    for li, layer in enumerate(raw["lstms"]):
        h, c = states[li]
        H = h.shape[-1]
        w_ih_t, w_hh_t = layer["w_ih"].T, layer["w_hh"].T
        bias = (layer["b_ih"] + layer["b_hh"])[None, :]
        ys = []
        for t in range(x.shape[1]):
            gates = x[:, t, :] @ w_ih_t + h @ w_hh_t + bias
            i_g = jax.nn.sigmoid(gates[:, 0 * H:1 * H])
            f_g = jax.nn.sigmoid(gates[:, 1 * H:2 * H])
            g_g = jnp.tanh(gates[:, 2 * H:3 * H])
            o_g = jax.nn.sigmoid(gates[:, 3 * H:4 * H])
            c = f_g * c + i_g * g_g
            h = o_g * jnp.tanh(c)
            ys.append(h)
        x = jnp.stack(ys, axis=1)
        new_states.append((h, c))
    scores = x.reshape(-1, x.shape[-1]) @ raw["fc_w"].T + raw["fc_b"][None, :]
    return scores.reshape(x.shape[0], x.shape[1], -1), new_states


if __name__ == "__main__":
    vocab_size = 64
    embed_dims = 32
    num_layers = 2
    init_range = 0.1
    B, T = 8, 8

    key = jax.random.PRNGKey(0)
    pkey, tkey = jax.random.split(key)
    raw = init_raw_params(pkey, vocab_size, embed_dims, num_layers, init_range)
    params = prepare_params(raw)
    tokens = jax.random.randint(tkey, (B, T), 0, vocab_size, dtype=jnp.int32)
    states = init_state(B, embed_dims, num_layers)

    scores, new_states = lstm_model_forward(tokens, params, states)
    jax.block_until_ready(scores)
    for h, c in new_states:
        jax.block_until_ready(h)
        jax.block_until_ready(c)

    assert scores.shape == (B, T, vocab_size)

    # Numerical check against the plain-JAX reference (tight f32 tolerance).
    scores_ref, states_ref = _reference_forward(tokens, raw, states)
    err_scores = float(jnp.max(jnp.abs(scores - scores_ref)))
    err_state = max(
        max(float(jnp.max(jnp.abs(h - hr))), float(jnp.max(jnp.abs(c - cr))))
        for (h, c), (hr, cr) in zip(new_states, states_ref))
    assert err_scores < 1e-4 and err_state < 1e-4, (err_scores, err_state)

    print("KERNEL_OK")
</pallas_src>

<mosaic_0001>
module attributes {stable_mosaic.version = 11 : i64} {
  func.func @_matmul_bias_kernel(%arg0: i32, %arg1: i32, %arg2: memref<64x32xf32, #tpu.memory_space<vmem>>, %arg3: memref<32x128xf32, #tpu.memory_space<vmem>>, %arg4: memref<1x128xf32, #tpu.memory_space<vmem>>, %arg5: memref<64x128xf32, #tpu.memory_space<vmem>>) attributes {dimension_semantics = [#tpu.dimension_semantics<parallel>, #tpu.dimension_semantics<parallel>], iteration_bounds = array<i64: 1, 1>, scalar_prefetch = 0 : i64, scratch_operands = 0 : i64, tpu.core_type = #tpu.core_type<tc>, window_params = [{transform_indices = @transform_0, window_bounds = array<i64: 64, 32>}, {transform_indices = @transform_1, window_bounds = array<i64: 32, 128>}, {transform_indices = @transform_2, window_bounds = array<i64: 1, 128>}, {transform_indices = @transform_3, window_bounds = array<i64: 64, 128>}]} {
    %c0 = arith.constant 0 : index
    %c0_0 = arith.constant 0 : index
    %0 = vector.load %arg2[%c0, %c0_0] : memref<64x32xf32, #tpu.memory_space<vmem>>, vector<64x32xf32>
    %c0_1 = arith.constant 0 : index
    %c0_2 = arith.constant 0 : index
    %1 = vector.load %arg3[%c0_1, %c0_2] : memref<32x128xf32, #tpu.memory_space<vmem>>, vector<32x128xf32>
    %cst = arith.constant dense<0.000000e+00> : vector<64x128xf32>
    %2 = tpu.matmul %0, %1, %cst {dimension_numbers = #tpu.dot_dimension_numbers<[1], [0], [0], [1], [0, 0, 1, 1], [], []>} : vector<64x32xf32>, vector<32x128xf32>, vector<64x128xf32> -> vector<64x128xf32>
    %c0_3 = arith.constant 0 : index
    %c0_4 = arith.constant 0 : index
    %3 = vector.load %arg4[%c0_3, %c0_4] : memref<1x128xf32, #tpu.memory_space<vmem>>, vector<1x128xf32>
    %4 = vector.broadcast %3 : vector<1x128xf32> to vector<64x128xf32>
    %5 = arith.addf %2, %4 : vector<64x128xf32>
    %c0_5 = arith.constant 0 : index
    %c0_6 = arith.constant 0 : index
    %6 = vector.load %arg5[%c0_5, %c0_6] : memref<64x128xf32, #tpu.memory_space<vmem>>, vector<64x128xf32>
    tpu.vector_store %arg5[%c0_5, %c0_6], %5 {strides = array<i32>} : memref<64x128xf32, #tpu.memory_space<vmem>>, vector<64x128xf32>,
    return
  }
  func.func @transform_0(%arg0: i32, %arg1: i32) -> (i32, i32) {
    %c0_i32 = arith.constant 0 : i32
    %c0_i32_0 = arith.constant 0 : i32
    return %arg1, %c0_i32 : i32, i32
  }
  func.func @transform_1(%arg0: i32, %arg1: i32) -> (i32, i32) {
    %c0_i32 = arith.constant 0 : i32
    %c0_i32_0 = arith.constant 0 : i32
    return %c0_i32, %arg0 : i32, i32
  }
  func.func @transform_2(%arg0: i32, %arg1: i32) -> (i32, i32) {
    %c0_i32 = arith.constant 0 : i32
    %c0_i32_0 = arith.constant 0 : i32
    return %c0_i32, %arg0 : i32, i32
  }
  func.func @transform_3(%arg0: i32, %arg1: i32) -> (i32, i32) {
    %c0_i32 = arith.constant 0 : i32
    return %arg1, %arg0 : i32, i32
  }
}

module attributes {stable_mosaic.version = 11 : i64} {
  func.func @_lstm_fused_kernel(%arg0: i32, %arg1: i32, %arg2: memref<8x8x32xf32, #tpu.memory_space<vmem>>, %arg3: memref<32x128xf32, #tpu.memory_space<vmem>>, %arg4: memref<32x128xf32, #tpu.memory_space<vmem>>, %arg5: memref<1x128xf32, #tpu.memory_space<vmem>>, %arg6: memref<8x32xf32, #tpu.memory_space<vmem>>, %arg7: memref<8x32xf32, #tpu.memory_space<vmem>>, %arg8: memref<8x8x32xf32, #tpu.memory_space<vmem>>, %arg9: memref<8x32xf32, #tpu.memory_space<vmem>>, %arg10: memref<8x32xf32, #tpu.memory_space<vmem>>, %arg11: memref<8x32xf32, #tpu.memory_space<vmem>>, %arg12: memref<8x32xf32, #tpu.memory_space<vmem>>, %arg13: memref<8x8x128xf32, #tpu.memory_space<vmem>>) attributes {dimension_semantics = [#tpu.dimension_semantics<parallel>, #tpu.dimension_semantics<arbitrary>], iteration_bounds = array<i64: 1, 1>, scalar_prefetch = 0 : i64, scratch_operands = 3 : i64, tpu.core_type = #tpu.core_type<tc>, window_params = [{transform_indices = @transform_0, window_bounds = array<i64: 8, 8, 32>}, {pipeline_mode = #tpu.pipeline_mode<synchronous>, transform_indices = @transform_1, window_bounds = array<i64: 32, 128>}, {pipeline_mode = #tpu.pipeline_mode<synchronous>, transform_indices = @transform_2, window_bounds = array<i64: 32, 128>}, {pipeline_mode = #tpu.pipeline_mode<synchronous>, transform_indices = @transform_3, window_bounds = array<i64: 1, 128>}, {transform_indices = @transform_4, window_bounds = array<i64: 8, 32>}, {transform_indices = @transform_5, window_bounds = array<i64: 8, 32>}, {transform_indices = @transform_6, window_bounds = array<i64: 8, 8, 32>}, {transform_indices = @transform_7, window_bounds = array<i64: 8, 32>}, {transform_indices = @transform_8, window_bounds = array<i64: 8, 32>}]} {
    %c0_i32 = arith.constant 0 : i32
    %0 = arith.cmpi eq, %arg1, %c0_i32 : i32
    %1 = arith.extui %0 : i1 to i32
    %c0_i32_0 = arith.constant 0 : i32
    %2 = arith.cmpi ne, %1, %c0_i32_0 : i32
    scf.if %2 {
      %c0_71 = arith.constant 0 : index
      %c0_72 = arith.constant 0 : index
      %220 = vector.load %arg6[%c0_71, %c0_72] : memref<8x32xf32, #tpu.memory_space<vmem>>, vector<8x32xf32>
      %c0_73 = arith.constant 0 : index
      %c0_74 = arith.constant 0 : index
      %221 = vector.load %arg11[%c0_73, %c0_74] : memref<8x32xf32, #tpu.memory_space<vmem>>, vector<8x32xf32>
      tpu.vector_store %arg11[%c0_73, %c0_74], %220 {strides = array<i32>} : memref<8x32xf32, #tpu.memory_space<vmem>>, vector<8x32xf32>,
      %c0_75 = arith.constant 0 : index
      %c0_76 = arith.constant 0 : index
      %222 = vector.load %arg7[%c0_75, %c0_76] : memref<8x32xf32, #tpu.memory_space<vmem>>, vector<8x32xf32>
      %c0_77 = arith.constant 0 : index
      %c0_78 = arith.constant 0 : index
      %223 = vector.load %arg12[%c0_77, %c0_78] : memref<8x32xf32, #tpu.memory_space<vmem>>, vector<8x32xf32>
      tpu.vector_store %arg12[%c0_77, %c0_78], %222 {strides = array<i32>} : memref<8x32xf32, #tpu.memory_space<vmem>>, vector<8x32xf32>,
    } else {
    }
    %c0 = arith.constant 0 : index
    %c0_1 = arith.constant 0 : index
    %c0_2 = arith.constant 0 : index
    %3 = vector.load %arg2[%c0, %c0_1, %c0_2] : memref<8x8x32xf32, #tpu.memory_space<vmem>>, vector<8x8x32xf32>
    %4 = vector.shape_cast %3 : vector<8x8x32xf32> to vector<64x32xf32>
    %c0_3 = arith.constant 0 : index
    %c0_4 = arith.constant 0 : index
    %5 = vector.load %arg3[%c0_3, %c0_4] : memref<32x128xf32, #tpu.memory_space<vmem>>, vector<32x128xf32>
    %cst = arith.constant dense<0.000000e+00> : vector<64x128xf32>
    %6 = tpu.matmul %4, %5, %cst {dimension_numbers = #tpu.dot_dimension_numbers<[1], [0], [0], [1], [0, 0, 1, 1], [], []>} : vector<64x32xf32>, vector<32x128xf32>, vector<64x128xf32> -> vector<64x128xf32>
    %c0_5 = arith.constant 0 : index
    %c0_6 = arith.constant 0 : index
    %7 = vector.load %arg5[%c0_5, %c0_6] : memref<1x128xf32, #tpu.memory_space<vmem>>, vector<1x128xf32>
    %8 = vector.broadcast %7 : vector<1x128xf32> to vector<64x128xf32>
    %9 = arith.addf %6, %8 : vector<64x128xf32>
    %10 = vector.shape_cast %9 : vector<64x128xf32> to vector<8x8x128xf32>
    %c0_7 = arith.constant 0 : index
    %c0_8 = arith.constant 0 : index
    %c0_9 = arith.constant 0 : index
    %11 = vector.load %arg13[%c0_7, %c0_8, %c0_9] : memref<8x8x128xf32, #tpu.memory_space<vmem>>, vector<8x8x128xf32>
    tpu.vector_store %arg13[%c0_7, %c0_8, %c0_9], %10 {strides = array<i32>} : memref<8x8x128xf32, #tpu.memory_space<vmem>>, vector<8x8x128xf32>,
    %c0_10 = arith.constant 0 : index
    %c0_11 = arith.constant 0 : index
    %12 = vector.load %arg4[%c0_10, %c0_11] : memref<32x128xf32, #tpu.memory_space<vmem>>, vector<32x128xf32>
    %c0_12 = arith.constant 0 : index
    %c0_13 = arith.constant 0 : index
    %13 = vector.load %arg11[%c0_12, %c0_13] : memref<8x32xf32, #tpu.memory_space<vmem>>, vector<8x32xf32>
    %c0_14 = arith.constant 0 : index
    %c0_15 = arith.constant 0 : index
    %14 = vector.load %arg12[%c0_14, %c0_15] : memref<8x32xf32, #tpu.memory_space<vmem>>, vector<8x32xf32>
    %c0_i32_16 = arith.constant 0 : i32
    %15 = arith.index_cast %c0_i32_16 : i32 to index
    %c0_17 = arith.constant 0 : index
    %c0_18 = arith.constant 0 : index
    %16 = vector.load %arg13[%15, %c0_17, %c0_18] : memref<8x8x128xf32, #tpu.memory_space<vmem>>, vector<1x8x128xf32>
    %17 = vector.shape_cast %16 : vector<1x8x128xf32> to vector<8x128xf32>
    %cst_19 = arith.constant dense<0.000000e+00> : vector<8x128xf32>
    %18 = tpu.matmul %13, %12, %cst_19 {dimension_numbers = #tpu.dot_dimension_numbers<[1], [0], [0], [1], [0, 0, 1, 1], [], []>} : vector<8x32xf32>, vector<32x128xf32>, vector<8x128xf32> -> vector<8x128xf32>
    %19 = arith.addf %17, %18 : vector<8x128xf32>
    %20 = vector.extract_strided_slice %19 {offsets = [0, 0], sizes = [8, 96], strides = [1, 1]} : vector<8x128xf32> to vector<8x96xf32>
    %21 = arith.negf %20 : vector<8x96xf32>
    %22 = math.exp %21 : vector<8x96xf32>
    %cst_20 = arith.constant 1.000000e+00 : f32
    %23 = vector.broadcast %cst_20 : f32 to vector<8x96xf32>
    %24 = arith.addf %23, %22 : vector<8x96xf32>
    %25 = arith.divf %23, %24 : vector<8x96xf32>
    %26 = vector.extract_strided_slice %19 {offsets = [0, 96], sizes = [8, 32], strides = [1, 1]} : vector<8x128xf32> to vector<8x32xf32>
    %27 = math.tanh %26 : vector<8x32xf32>
    %28 = vector.extract_strided_slice %25 {offsets = [0, 32], sizes = [8, 32], strides = [1, 1]} : vector<8x96xf32> to vector<8x32xf32>
    %29 = arith.mulf %28, %14 : vector<8x32xf32>
    %30 = vector.extract_strided_slice %25 {offsets = [0, 0], sizes = [8, 32], strides = [1, 1]} : vector<8x96xf32> to vector<8x32xf32>
    %31 = arith.mulf %30, %27 : vector<8x32xf32>
    %32 = arith.addf %29, %31 : vector<8x32xf32>
    %33 = vector.extract_strided_slice %25 {offsets = [0, 64], sizes = [8, 32], strides = [1, 1]} : vector<8x96xf32> to vector<8x32xf32>
    %34 = math.tanh %32 : vector<8x32xf32>
    %35 = arith.mulf %33, %34 : vector<8x32xf32>
    %36 = arith.index_cast %c0_i32_16 : i32 to index
    %c0_21 = arith.constant 0 : index
    %c0_22 = arith.constant 0 : index
    %37 = vector.load %arg8[%36, %c0_21, %c0_22] : memref<8x8x32xf32, #tpu.memory_space<vmem>>, vector<1x8x32xf32>
    %38 = vector.shape_cast %37 : vector<1x8x32xf32> to vector<8x32xf32>
    %39 = vector.shape_cast %35 : vector<8x32xf32> to vector<1x8x32xf32>
    tpu.vector_store %arg8[%36, %c0_21, %c0_22], %39 {strides = array<i32>} : memref<8x8x32xf32, #tpu.memory_space<vmem>>, vector<1x8x32xf32>,
    %c1_i32 = arith.constant 1 : i32
    %40 = arith.index_cast %c1_i32 : i32 to index
    %c0_23 = arith.constant 0 : index
    %c0_24 = arith.constant 0 : index
    %41 = vector.load %arg13[%40, %c0_23, %c0_24] : memref<8x8x128xf32, #tpu.memory_space<vmem>>, vector<1x8x128xf32>
    %42 = vector.shape_cast %41 : vector<1x8x128xf32> to vector<8x128xf32>
    %cst_25 = arith.constant dense<0.000000e+00> : vector<8x128xf32>
    %43 = tpu.matmul %35, %12, %cst_25 {dimension_numbers = #tpu.dot_dimension_numbers<[1], [0], [0], [1], [0, 0, 1, 1], [], []>} : vector<8x32xf32>, vector<32x128xf32>, vector<8x128xf32> -> vector<8x128xf32>
    %44 = arith.addf %42, %43 : vector<8x128xf32>
    %45 = vector.extract_strided_slice %44 {offsets = [0, 0], sizes = [8, 96], strides = [1, 1]} : vector<8x128xf32> to vector<8x96xf32>
    %46 = arith.negf %45 : vector<8x96xf32>
    %47 = math.exp %46 : vector<8x96xf32>
    %cst_26 = arith.constant 1.000000e+00 : f32
    %48 = vector.broadcast %cst_26 : f32 to vector<8x96xf32>
    %49 = arith.addf %48, %47 : vector<8x96xf32>
    %50 = arith.divf %48, %49 : vector<8x96xf32>
    %51 = vector.extract_strided_slice %44 {offsets = [0, 96], sizes = [8, 32], strides = [1, 1]} : vector<8x128xf32> to vector<8x32xf32>
    %52 = math.tanh %51 : vector<8x32xf32>
    %53 = vector.extract_strided_slice %50 {offsets = [0, 32], sizes = [8, 32], strides = [1, 1]} : vector<8x96xf32> to vector<8x32xf32>
    %54 = arith.mulf %53, %32 : vector<8x32xf32>
    %55 = vector.extract_strided_slice %50 {offsets = [0, 0], sizes = [8, 32], strides = [1, 1]} : vector<8x96xf32> to vector<8x32xf32>
    %56 = arith.mulf %55, %52 : vector<8x32xf32>
    %57 = arith.addf %54, %56 : vector<8x32xf32>
    %58 = vector.extract_strided_slice %50 {offsets = [0, 64], sizes = [8, 32], strides = [1, 1]} : vector<8x96xf32> to vector<8x32xf32>
    %59 = math.tanh %57 : vector<8x32xf32>
    %60 = arith.mulf %58, %59 : vector<8x32xf32>
    %61 = arith.index_cast %c1_i32 : i32 to index
    %c0_27 = arith.constant 0 : index
    %c0_28 = arith.constant 0 : index
    %62 = vector.load %arg8[%61, %c0_27, %c0_28] : memref<8x8x32xf32, #tpu.memory_space<vmem>>, vector<1x8x32xf32>
    %63 = vector.shape_cast %62 : vector<1x8x32xf32> to vector<8x32xf32>
    %64 = vector.shape_cast %60 : vector<8x32xf32> to vector<1x8x32xf32>
    tpu.vector_store %arg8[%61, %c0_27, %c0_28], %64 {strides = array<i32>} : memref<8x8x32xf32, #tpu.memory_space<vmem>>, vector<1x8x32xf32>,
    %c2_i32 = arith.constant 2 : i32
    %65 = arith.index_cast %c2_i32 : i32 to index
    %c0_29 = arith.constant 0 : index
    %c0_30 = arith.constant 0 : index
    %66 = vector.load %arg13[%65, %c0_29, %c0_30] : memref<8x8x128xf32, #tpu.memory_space<vmem>>, vector<1x8x128xf32>
    %67 = vector.shape_cast %66 : vector<1x8x128xf32> to vector<8x128xf32>
    %cst_31 = arith.constant dense<0.000000e+00> : vector<8x128xf32>
    %68 = tpu.matmul %60, %12, %cst_31 {dimension_numbers = #tpu.dot_dimension_numbers<[1], [0], [0], [1], [0, 0, 1, 1], [], []>} : vector<8x32xf32>, vector<32x128xf32>, vector<8x128xf32> -> vector<8x128xf32>
    %69 = arith.addf %67, %68 : vector<8x128xf32>
    %70 = vector.extract_strided_slice %69 {offsets = [0, 0], sizes = [8, 96], strides = [1, 1]} : vector<8x128xf32> to vector<8x96xf32>
    %71 = arith.negf %70 : vector<8x96xf32>
    %72 = math.exp %71 : vector<8x96xf32>
    %cst_32 = arith.constant 1.000000e+00 : f32
    %73 = vector.broadcast %cst_32 : f32 to vector<8x96xf32>
    %74 = arith.addf %73, %72 : vector<8x96xf32>
    %75 = arith.divf %73, %74 : vector<8x96xf32>
    %76 = vector.extract_strided_slice %69 {offsets = [0, 96], sizes = [8, 32], strides = [1, 1]} : vector<8x128xf32> to vector<8x32xf32>
    %77 = math.tanh %76 : vector<8x32xf32>
    %78 = vector.extract_strided_slice %75 {offsets = [0, 32], sizes = [8, 32], strides = [1, 1]} : vector<8x96xf32> to vector<8x32xf32>
    %79 = arith.mulf %78, %57 : vector<8x32xf32>
    %80 = vector.extract_strided_slice %75 {offsets = [0, 0], sizes = [8, 32], strides = [1, 1]} : vector<8x96xf32> to vector<8x32xf32>
    %81 = arith.mulf %80, %77 : vector<8x32xf32>
    %82 = arith.addf %79, %81 : vector<8x32xf32>
    %83 = vector.extract_strided_slice %75 {offsets = [0, 64], sizes = [8, 32], strides = [1, 1]} : vector<8x96xf32> to vector<8x32xf32>
    %84 = math.tanh %82 : vector<8x32xf32>
    %85 = arith.mulf %83, %84 : vector<8x32xf32>
    %86 = arith.index_cast %c2_i32 : i32 to index
    %c0_33 = arith.constant 0 : index
    %c0_34 = arith.constant 0 : index
    %87 = vector.load %arg8[%86, %c0_33, %c0_34] : memref<8x8x32xf32, #tpu.memory_space<vmem>>, vector<1x8x32xf32>
    %88 = vector.shape_cast %87 : vector<1x8x32xf32> to vector<8x32xf32>
    %89 = vector.shape_cast %85 : vector<8x32xf32> to vector<1x8x32xf32>
    tpu.vector_store %arg8[%86, %c0_33, %c0_34], %89 {strides = array<i32>} : memref<8x8x32xf32, #tpu.memory_space<vmem>>, vector<1x8x32xf32>,
    %c3_i32 = arith.constant 3 : i32
    %90 = arith.index_cast %c3_i32 : i32 to index
    %c0_35 = arith.constant 0 : index
    %c0_36 = arith.constant 0 : index
    %91 = vector.load %arg13[%90, %c0_35, %c0_36] : memref<8x8x128xf32, #tpu.memory_space<vmem>>, vector<1x8x128xf32>
    %92 = vector.shape_cast %91 : vector<1x8x128xf32> to vector<8x128xf32>
    %cst_37 = arith.constant dense<0.000000e+00> : vector<8x128xf32>
    %93 = tpu.matmul %85, %12, %cst_37 {dimension_numbers = #tpu.dot_dimension_numbers<[1], [0], [0], [1], [0, 0, 1, 1], [], []>} : vector<8x32xf32>, vector<32x128xf32>, vector<8x128xf32> -> vector<8x128xf32>
    %94 = arith.addf %92, %93 : vector<8x128xf32>
    %95 = vector.extract_strided_slice %94 {offsets = [0, 0], sizes = [8, 96], strides = [1, 1]} : vector<8x128xf32> to vector<8x96xf32>
    %96 = arith.negf %95 : vector<8x96xf32>
    %97 = math.exp %96 : vector<8x96xf32>
    %cst_38 = arith.constant 1.000000e+00 : f32
    %98 = vector.broadcast %cst_38 : f32 to vector<8x96xf32>
    %99 = arith.addf %98, %97 : vector<8x96xf32>
    %100 = arith.divf %98, %99 : vector<8x96xf32>
    %101 = vector.extract_strided_slice %94 {offsets = [0, 96], sizes = [8, 32], strides = [1, 1]} : vector<8x128xf32> to vector<8x32xf32>
    %102 = math.tanh %101 : vector<8x32xf32>
    %103 = vector.extract_strided_slice %100 {offsets = [0, 32], sizes = [8, 32], strides = [1, 1]} : vector<8x96xf32> to vector<8x32xf32>
    %104 = arith.mulf %103, %82 : vector<8x32xf32>
    %105 = vector.extract_strided_slice %100 {offsets = [0, 0], sizes = [8, 32], strides = [1, 1]} : vector<8x96xf32> to vector<8x32xf32>
    %106 = arith.mulf %105, %102 : vector<8x32xf32>
    %107 = arith.addf %104, %106 : vector<8x32xf32>
    %108 = vector.extract_strided_slice %100 {offsets = [0, 64], sizes = [8, 32], strides = [1, 1]} : vector<8x96xf32> to vector<8x32xf32>
    %109 = math.tanh %107 : vector<8x32xf32>
    %110 = arith.mulf %108, %109 : vector<8x32xf32>
    %111 = arith.index_cast %c3_i32 : i32 to index
    %c0_39 = arith.constant 0 : index
    %c0_40 = arith.constant 0 : index
    %112 = vector.load %arg8[%111, %c0_39, %c0_40] : memref<8x8x32xf32, #tpu.memory_space<vmem>>, vector<1x8x32xf32>
    %113 = vector.shape_cast %112 : vector<1x8x32xf32> to vector<8x32xf32>
    %114 = vector.shape_cast %110 : vector<8x32xf32> to vector<1x8x32xf32>
    tpu.vector_store %arg8[%111, %c0_39, %c0_40], %114 {strides = array<i32>} : memref<8x8x32xf32, #tpu.memory_space<vmem>>, vector<1x8x32xf32>,
    %c4_i32 = arith.constant 4 : i32
    %115 = arith.index_cast %c4_i32 : i32 to index
    %c0_41 = arith.constant 0 : index
    %c0_42 = arith.constant 0 : index
    %116 = vector.load %arg13[%115, %c0_41, %c0_42] : memref<8x8x128xf32, #tpu.memory_space<vmem>>, vector<1x8x128xf32>
    %117 = vector.shape_cast %116 : vector<1x8x128xf32> to vector<8x128xf32>
    %cst_43 = arith.constant dense<0.000000e+00> : vector<8x128xf32>
    %118 = tpu.matmul %110, %12, %cst_43 {dimension_numbers = #tpu.dot_dimension_numbers<[1], [0], [0], [1], [0, 0, 1, 1], [], []>} : vector<8x32xf32>, vector<32x128xf32>, vector<8x128xf32> -> vector<8x128xf32>
    %119 = arith.addf %117, %118 : vector<8x128xf32>
    %120 = vector.extract_strided_slice %119 {offsets = [0, 0], sizes = [8, 96], strides = [1, 1]} : vector<8x128xf32> to vector<8x96xf32>
    %121 = arith.negf %120 : vector<8x96xf32>
    %122 = math.exp %121 : vector<8x96xf32>
    %cst_44 = arith.constant 1.000000e+00 : f32
    %123 = vector.broadcast %cst_44 : f32 to vector<8x96xf32>
    %124 = arith.addf %123, %122 : vector<8x96xf32>
    %125 = arith.divf %123, %124 : vector<8x96xf32>
    %126 = vector.extract_strided_slice %119 {offsets = [0, 96], sizes = [8, 32], strides = [1, 1]} : vector<8x128xf32> to vector<8x32xf32>
    %127 = math.tanh %126 : vector<8x32xf32>
    %128 = vector.extract_strided_slice %125 {offsets = [0, 32], sizes = [8, 32], strides = [1, 1]} : vector<8x96xf32> to vector<8x32xf32>
    %129 = arith.mulf %128, %107 : vector<8x32xf32>
    %130 = vector.extract_strided_slice %125 {offsets = [0, 0], sizes = [8, 32], strides = [1, 1]} : vector<8x96xf32> to vector<8x32xf32>
    %131 = arith.mulf %130, %127 : vector<8x32xf32>
    %132 = arith.addf %129, %131 : vector<8x32xf32>
    %133 = vector.extract_strided_slice %125 {offsets = [0, 64], sizes = [8, 32], strides = [1, 1]} : vector<8x96xf32> to vector<8x32xf32>
    %134 = math.tanh %132 : vector<8x32xf32>
    %135 = arith.mulf %133, %134 : vector<8x32xf32>
    %136 = arith.index_cast %c4_i32 : i32 to index
    %c0_45 = arith.constant 0 : index
    %c0_46 = arith.constant 0 : index
    %137 = vector.load %arg8[%136, %c0_45, %c0_46] : memref<8x8x32xf32, #tpu.memory_space<vmem>>, vector<1x8x32xf32>
    %138 = vector.shape_cast %137 : vector<1x8x32xf32> to vector<8x32xf32>
    %139 = vector.shape_cast %135 : vector<8x32xf32> to vector<1x8x32xf32>
    tpu.vector_store %arg8[%136, %c0_45, %c0_46], %139 {strides = array<i32>} : memref<8x8x32xf32, #tpu.memory_space<vmem>>, vector<1x8x32xf32>,
    %c5_i32 = arith.constant 5 : i32
    %140 = arith.index_cast %c5_i32 : i32 to index
    %c0_47 = arith.constant 0 : index
    %c0_48 = arith.constant 0 : index
    %141 = vector.load %arg13[%140, %c0_47, %c0_48] : memref<8x8x128xf32, #tpu.memory_space<vmem>>, vector<1x8x128xf32>
    %142 = vector.shape_cast %141 : vector<1x8x128xf32> to vector<8x128xf32>
    %cst_49 = arith.constant dense<0.000000e+00> : vector<8x128xf32>
    %143 = tpu.matmul %135, %12, %cst_49 {dimension_numbers = #tpu.dot_dimension_numbers<[1], [0], [0], [1], [0, 0, 1, 1], [], []>} : vector<8x32xf32>, vector<32x128xf32>, vector<8x128xf32> -> vector<8x128xf32>
    %144 = arith.addf %142, %143 : vector<8x128xf32>
    %145 = vector.extract_strided_slice %144 {offsets = [0, 0], sizes = [8, 96], strides = [1, 1]} : vector<8x128xf32> to vector<8x96xf32>
    %146 = arith.negf %145 : vector<8x96xf32>
    %147 = math.exp %146 : vector<8x96xf32>
    %cst_50 = arith.constant 1.000000e+00 : f32
    %148 = vector.broadcast %cst_50 : f32 to vector<8x96xf32>
    %149 = arith.addf %148, %147 : vector<8x96xf32>
    %150 = arith.divf %148, %149 : vector<8x96xf32>
    %151 = vector.extract_strided_slice %144 {offsets = [0, 96], sizes = [8, 32], strides = [1, 1]} : vector<8x128xf32> to vector<8x32xf32>
    %152 = math.tanh %151 : vector<8x32xf32>
    %153 = vector.extract_strided_slice %150 {offsets = [0, 32], sizes = [8, 32], strides = [1, 1]} : vector<8x96xf32> to vector<8x32xf32>
    %154 = arith.mulf %153, %132 : vector<8x32xf32>
    %155 = vector.extract_strided_slice %150 {offsets = [0, 0], sizes = [8, 32], strides = [1, 1]} : vector<8x96xf32> to vector<8x32xf32>
    %156 = arith.mulf %155, %152 : vector<8x32xf32>
    %157 = arith.addf %154, %156 : vector<8x32xf32>
    %158 = vector.extract_strided_slice %150 {offsets = [0, 64], sizes = [8, 32], strides = [1, 1]} : vector<8x96xf32> to vector<8x32xf32>
    %159 = math.tanh %157 : vector<8x32xf32>
    %160 = arith.mulf %158, %159 : vector<8x32xf32>
    %161 = arith.index_cast %c5_i32 : i32 to index
    %c0_51 = arith.constant 0 : index
    %c0_52 = arith.constant 0 : index
    %162 = vector.load %arg8[%161, %c0_51, %c0_52] : memref<8x8x32xf32, #tpu.memory_space<vmem>>, vector<1x8x32xf32>
    %163 = vector.shape_cast %162 : vector<1x8x32xf32> to vector<8x32xf32>
    %164 = vector.shape_cast %160 : vector<8x32xf32> to vector<1x8x32xf32>
    tpu.vector_store %arg8[%161, %c0_51, %c0_52], %164 {strides = array<i32>} : memref<8x8x32xf32, #tpu.memory_space<vmem>>, vector<1x8x32xf32>,
    %c6_i32 = arith.constant 6 : i32
    %165 = arith.index_cast %c6_i32 : i32 to index
    %c0_53 = arith.constant 0 : index
    %c0_54 = arith.constant 0 : index
    %166 = vector.load %arg13[%165, %c0_53, %c0_54] : memref<8x8x128xf32, #tpu.memory_space<vmem>>, vector<1x8x128xf32>
    %167 = vector.shape_cast %166 : vector<1x8x128xf32> to vector<8x128xf32>
    %cst_55 = arith.constant dense<0.000000e+00> : vector<8x128xf32>
    %168 = tpu.matmul %160, %12, %cst_55 {dimension_numbers = #tpu.dot_dimension_numbers<[1], [0], [0], [1], [0, 0, 1, 1], [], []>} : vector<8x32xf32>, vector<32x128xf32>, vector<8x128xf32> -> vector<8x128xf32>
    %169 = arith.addf %167, %168 : vector<8x128xf32>
    %170 = vector.extract_strided_slice %169 {offsets = [0, 0], sizes = [8, 96], strides = [1, 1]} : vector<8x128xf32> to vector<8x96xf32>
    %171 = arith.negf %170 : vector<8x96xf32>
    %172 = math.exp %171 : vector<8x96xf32>
    %cst_56 = arith.constant 1.000000e+00 : f32
    %173 = vector.broadcast %cst_56 : f32 to vector<8x96xf32>
    %174 = arith.addf %173, %172 : vector<8x96xf32>
    %175 = arith.divf %173, %174 : vector<8x96xf32>
    %176 = vector.extract_strided_slice %169 {offsets = [0, 96], sizes = [8, 32], strides = [1, 1]} : vector<8x128xf32> to vector<8x32xf32>
    %177 = math.tanh %176 : vector<8x32xf32>
    %178 = vector.extract_strided_slice %175 {offsets = [0, 32], sizes = [8, 32], strides = [1, 1]} : vector<8x96xf32> to vector<8x32xf32>
    %179 = arith.mulf %178, %157 : vector<8x32xf32>
    %180 = vector.extract_strided_slice %175 {offsets = [0, 0], sizes = [8, 32], strides = [1, 1]} : vector<8x96xf32> to vector<8x32xf32>
    %181 = arith.mulf %180, %177 : vector<8x32xf32>
    %182 = arith.addf %179, %181 : vector<8x32xf32>
    %183 = vector.extract_strided_slice %175 {offsets = [0, 64], sizes = [8, 32], strides = [1, 1]} : vector<8x96xf32> to vector<8x32xf32>
    %184 = math.tanh %182 : vector<8x32xf32>
    %185 = arith.mulf %183, %184 : vector<8x32xf32>
    %186 = arith.index_cast %c6_i32 : i32 to index
    %c0_57 = arith.constant 0 : index
    %c0_58 = arith.constant 0 : index
    %187 = vector.load %arg8[%186, %c0_57, %c0_58] : memref<8x8x32xf32, #tpu.memory_space<vmem>>, vector<1x8x32xf32>
    %188 = vector.shape_cast %187 : vector<1x8x32xf32> to vector<8x32xf32>
    %189 = vector.shape_cast %185 : vector<8x32xf32> to vector<1x8x32xf32>
    tpu.vector_store %arg8[%186, %c0_57, %c0_58], %189 {strides = array<i32>} : memref<8x8x32xf32, #tpu.memory_space<vmem>>, vector<1x8x32xf32>,
    %c7_i32 = arith.constant 7 : i32
    %190 = arith.index_cast %c7_i32 : i32 to index
    %c0_59 = arith.constant 0 : index
    %c0_60 = arith.constant 0 : index
    %191 = vector.load %arg13[%190, %c0_59, %c0_60] : memref<8x8x128xf32, #tpu.memory_space<vmem>>, vector<1x8x128xf32>
    %192 = vector.shape_cast %191 : vector<1x8x128xf32> to vector<8x128xf32>
    %cst_61 = arith.constant dense<0.000000e+00> : vector<8x128xf32>
    %193 = tpu.matmul %185, %12, %cst_61 {dimension_numbers = #tpu.dot_dimension_numbers<[1], [0], [0], [1], [0, 0, 1, 1], [], []>} : vector<8x32xf32>, vector<32x128xf32>, vector<8x128xf32> -> vector<8x128xf32>
    %194 = arith.addf %192, %193 : vector<8x128xf32>
    %195 = vector.extract_strided_slice %194 {offsets = [0, 0], sizes = [8, 96], strides = [1, 1]} : vector<8x128xf32> to vector<8x96xf32>
    %196 = arith.negf %195 : vector<8x96xf32>
    %197 = math.exp %196 : vector<8x96xf32>
    %cst_62 = arith.constant 1.000000e+00 : f32
    %198 = vector.broadcast %cst_62 : f32 to vector<8x96xf32>
    %199 = arith.addf %198, %197 : vector<8x96xf32>
    %200 = arith.divf %198, %199 : vector<8x96xf32>
    %201 = vector.extract_strided_slice %194 {offsets = [0, 96], sizes = [8, 32], strides = [1, 1]} : vector<8x128xf32> to vector<8x32xf32>
    %202 = math.tanh %201 : vector<8x32xf32>
    %203 = vector.extract_strided_slice %200 {offsets = [0, 32], sizes = [8, 32], strides = [1, 1]} : vector<8x96xf32> to vector<8x32xf32>
    %204 = arith.mulf %203, %182 : vector<8x32xf32>
    %205 = vector.extract_strided_slice %200 {offsets = [0, 0], sizes = [8, 32], strides = [1, 1]} : vector<8x96xf32> to vector<8x32xf32>
    %206 = arith.mulf %205, %202 : vector<8x32xf32>
    %207 = arith.addf %204, %206 : vector<8x32xf32>
    %208 = vector.extract_strided_slice %200 {offsets = [0, 64], sizes = [8, 32], strides = [1, 1]} : vector<8x96xf32> to vector<8x32xf32>
    %209 = math.tanh %207 : vector<8x32xf32>
    %210 = arith.mulf %208, %209 : vector<8x32xf32>
    %211 = arith.index_cast %c7_i32 : i32 to index
    %c0_63 = arith.constant 0 : index
    %c0_64 = arith.constant 0 : index
    %212 = vector.load %arg8[%211, %c0_63, %c0_64] : memref<8x8x32xf32, #tpu.memory_space<vmem>>, vector<1x8x32xf32>
    %213 = vector.shape_cast %212 : vector<1x8x32xf32> to vector<8x32xf32>
    %214 = vector.shape_cast %210 : vector<8x32xf32> to vector<1x8x32xf32>
    tpu.vector_store %arg8[%211, %c0_63, %c0_64], %214 {strides = array<i32>} : memref<8x8x32xf32, #tpu.memory_space<vmem>>, vector<1x8x32xf32>,
    %c8_i32 = arith.constant 8 : i32
    %c0_65 = arith.constant 0 : index
    %c0_66 = arith.constant 0 : index
    %215 = vector.load %arg11[%c0_65, %c0_66] : memref<8x32xf32, #tpu.memory_space<vmem>>, vector<8x32xf32>
    tpu.vector_store %arg11[%c0_65, %c0_66], %210 {strides = array<i32>} : memref<8x32xf32, #tpu.memory_space<vmem>>, vector<8x32xf32>,
    %c0_67 = arith.constant 0 : index
    %c0_68 = arith.constant 0 : index
    %216 = vector.load %arg12[%c0_67, %c0_68] : memref<8x32xf32, #tpu.memory_space<vmem>>, vector<8x32xf32>
    tpu.vector_store %arg12[%c0_67, %c0_68], %207 {strides = array<i32>} : memref<8x32xf32, #tpu.memory_space<vmem>>, vector<8x32xf32>,
    %c0_i32_69 = arith.constant 0 : i32
    %217 = arith.cmpi eq, %arg1, %c0_i32_69 : i32
    %218 = arith.extui %217 : i1 to i32
    %c0_i32_70 = arith.constant 0 : i32
    %219 = arith.cmpi ne, %218, %c0_i32_70 : i32
    scf.if %219 {
      %c0_71 = arith.constant 0 : index
      %c0_72 = arith.constant 0 : index
      %220 = vector.load %arg9[%c0_71, %c0_72] : memref<8x32xf32, #tpu.memory_space<vmem>>, vector<8x32xf32>
      tpu.vector_store %arg9[%c0_71, %c0_72], %210 {strides = array<i32>} : memref<8x32xf32, #tpu.memory_space<vmem>>, vector<8x32xf32>,
      %c0_73 = arith.constant 0 : index
      %c0_74 = arith.constant 0 : index
      %221 = vector.load %arg10[%c0_73, %c0_74] : memref<8x32xf32, #tpu.memory_space<vmem>>, vector<8x32xf32>
      tpu.vector_store %arg10[%c0_73, %c0_74], %207 {strides = array<i32>} : memref<8x32xf32, #tpu.memory_space<vmem>>, vector<8x32xf32>,
    } else {
    }
    return
  }
  func.func @transform_0(%arg0: i32, %arg1: i32) -> (i32, i32, i32) {
    %c0_i32 = arith.constant 0 : i32
    %c0_i32_0 = arith.constant 0 : i32
    return %arg1, %arg0, %c0_i32 : i32, i32, i32
  }
  func.func @transform_1(%arg0: i32, %arg1: i32) -> (i32, i32) {
    %c0_i32 = arith.constant 0 : i32
    %c0_i32_0 = arith.constant 0 : i32
    %c0_i32_1 = arith.constant 0 : i32
    return %c0_i32, %c0_i32_0 : i32, i32
  }
  func.func @transform_2(%arg0: i32, %arg1: i32) -> (i32, i32) {
    %c0_i32 = arith.constant 0 : i32
    %c0_i32_0 = arith.constant 0 : i32
    %c0_i32_1 = arith.constant 0 : i32
    return %c0_i32, %c0_i32_0 : i32, i32
  }
  func.func @transform_3(%arg0: i32, %arg1: i32) -> (i32, i32) {
    %c0_i32 = arith.constant 0 : i32
    %c0_i32_0 = arith.constant 0 : i32
    %c0_i32_1 = arith.constant 0 : i32
    return %c0_i32, %c0_i32_0 : i32, i32
  }
  func.func @transform_4(%arg0: i32, %arg1: i32) -> (i32, i32) {
    %c0_i32 = arith.constant 0 : i32
    %c0_i32_0 = arith.constant 0 : i32
    return %arg0, %c0_i32 : i32, i32
  }
  func.func @transform_5(%arg0: i32, %arg1: i32) -> (i32, i32) {
    %c0_i32 = arith.constant 0 : i32
    %c0_i32_0 = arith.constant 0 : i32
    return %arg0, %c0_i32 : i32, i32
  }
  func.func @transform_6(%arg0: i32, %arg1: i32) -> (i32, i32, i32) {
    %c0_i32 = arith.constant 0 : i32
    %c0_i32_0 = arith.constant 0 : i32
    return %arg1, %arg0, %c0_i32 : i32, i32, i32
  }
  func.func @transform_7(%arg0: i32, %arg1: i32) -> (i32, i32) {
    %c0_i32 = arith.constant 0 : i32
    %c0_i32_0 = arith.constant 0 : i32
    return %arg0, %c0_i32 : i32, i32
  }
  func.func @transform_8(%arg0: i32, %arg1: i32) -> (i32, i32) {
    %c0_i32 = arith.constant 0 : i32
    %c0_i32_0 = arith.constant 0 : i32
    return %arg0, %c0_i32 : i32, i32
  }
}

</mosaic_0001>

<llo_original>
// kernel: lstm_model_forward.5
$region0: #{lstm_model_forward.5}
  #allocation0 [shape = 'u32[]', space=smem, size = 0x4, offset = 0x4, fixed_abs, tag = 'smem constant byte address 0x4 - core index']
  #allocation1 [shape = 'u32[144,128]{1,0:T(1,128)}', space=vmem, size = 0x12000, scoped, tag = 'internal scratch']
  %s0 = inlined_call_operand.vmem [shape: f32[64,32], index: 0, kind: input, shape index: {}]
  %s1 = inlined_call_operand.vmem [shape: f32[32,128], index: 1, kind: input, shape index: {}]
  %s2 = inlined_call_operand.vmem [shape: f32[1,128], index: 2, kind: input, shape index: {}]
  %s3 = inlined_call_operand.vmem [shape: f32[64,128], index: 3, kind: output, shape index: {}]
  %s4 = sld [smem:[#allocation0]]
  $region22: #{lstm_model_forward.5} parent=0
    _
  %s6 = ssub.s32 1, %s4
  %s7 = scalar_select 0, %s6, %s4
  // Predicated region
  $region2: #{lstm_model_forward.5} parent=0 // pred_check
    _
  $region3: #{lstm_model_forward.5} parent=0 // pred_check_branch
    %9 = sbr.rel (0) target = $region5
  $region4: #{lstm_model_forward.5} parent=0 // pred_region
    _
  $region5: #{lstm_model_forward.5} parent=0 // pred_fallthru
    _
  // Predicated region
  $region6: #{lstm_model_forward.5} parent=0 // pred_check
    _
  $region7: #{lstm_model_forward.5} parent=0 // pred_check_branch
    %11 = sbr.rel (0) target = $region9
  $region8: #{lstm_model_forward.5} parent=0 // pred_region
    _
  $region9: #{lstm_model_forward.5} parent=0 // pred_fallthru
    _
  // Predicated region
  $region10: #{lstm_model_forward.5} parent=0 // pred_check
    _
  $region11: #{lstm_model_forward.5} parent=0 // pred_check_branch
    %13 = sbr.rel (0) target = $region13
  $region12: #{lstm_model_forward.5} parent=0 // pred_region
    _
  $region13: #{lstm_model_forward.5} parent=0 // pred_fallthru
    _
  %v14 = vld [vmem:[%s0] sm:$0xff]
  %v15 = vld [vmem:[%s0 + $0x8] sm:$0xff]
  %v16 = vld [vmem:[%s0 + $0x10] sm:$0xff]
  %v17 = vld [vmem:[%s0 + $0x18] sm:$0xff]
  %v18 = vld [vmem:[%s0 + $0x20] sm:$0xff]
  %v19 = vld [vmem:[%s0 + $0x28] sm:$0xff]
  %v20 = vld [vmem:[%s0 + $0x30] sm:$0xff]
  %v21 = vld [vmem:[%s0 + $0x38] sm:$0xff]
  %v22 = vld [vmem:[%s1] sm:$0xff]
  %v23 = vld [vmem:[%s1 + $0x8] sm:$0xff]
  %v24 = vld [vmem:[%s1 + $0x10] sm:$0xff]
  %v25 = vld [vmem:[%s1 + $0x18] sm:$0xff]
  %v26 = vld [vmem:[%s2] sm:$0x1]
  %v28 = vlaneseq
  %v29 = vshrl.u32 %v28, 7
  %v30 = vsub.s32 0, %v29
  %v31 = vrot.slane %v26, %v30
  %vm33 = vcmask 261120
  %v35 = vsel %vm33, %v14, 0
  %v38 = vsel %vm33, %v15, 0
  %v41 = vsel %vm33, %v16, 0
  %v44 = vsel %vm33, %v17, 0
  %v47 = vsel %vm33, %v18, 0
  %v50 = vsel %vm33, %v19, 0
  %v53 = vsel %vm33, %v20, 0
  %v56 = vsel %vm33, %v21, 0
  %58 = vmatprep.subr.mxu0 0.0
  %59 = vmatpush1.msra.mxu0 0.0
  %60 = vmatprep.subr.mxu0 0.0
  %61 = vmatpush1.msra.mxu0 0.0
  %62 = vmatprep.subr.mxu0 0.0
  %63 = vmatpush1.msra.mxu0 0.0
  %64 = vmatprep.subr.mxu0 0.0
  %65 = vmatpush1.msra.mxu0 0.0
  %66 = vmatprep.subr.mxu0 0.0
  %67 = vmatpush1.msra.mxu0 0.0
  %68 = vmatprep.subr.mxu0 0.0
  %69 = vmatpush1.msra.mxu0 0.0
  %70 = vmatprep.subr.mxu0 0.0
  %71 = vmatpush1.msra.mxu0 0.0
  %72 = vmatprep.subr.mxu0 0.0
  %73 = vmatpush1.msra.mxu0 0.0
  %74 = vmatprep.subr.mxu0 0.0
  %75 = vmatpush1.msra.mxu0 0.0
  %76 = vmatprep.subr.mxu0 0.0
  %77 = vmatpush1.msra.mxu0 0.0
  %78 = vmatprep.subr.mxu0 0.0
  %79 = vmatpush1.msra.mxu0 0.0
  %80 = vmatprep.subr.mxu0 0.0
  %81 = vmatpush1.msra.mxu0 0.0
  %82 = vmatprep.subr.mxu0 0.0
  %83 = vmatpush1.msra.mxu0 %v25
  %84 = vmatprep.subr.mxu0 0.0
  %85 = vmatpush1.msra.mxu0 %v24
  %86 = vmatprep.subr.mxu0 0.0
  %87 = vmatpush1.msra.mxu0 %v23
  %88 = vmatprep.subr.mxu0 0.0
  %89 = vmatpush1.msra.mxu0 %v22
  %90 = vmatprep.subr.mxu0 0.0
  %91 = vmatpush2.msra.mxu0 0.0
  %92 = vmatprep.subr.mxu0 0.0
  %93 = vmatpush2.msra.mxu0 0.0
  %94 = vmatprep.subr.mxu0 0.0
  %95 = vmatpush2.msra.mxu0 0.0
  %96 = vmatprep.subr.mxu0 0.0
  %97 = vmatpush2.msra.mxu0 0.0
  %98 = vmatprep.subr.mxu0 0.0
  %99 = vmatpush2.msra.mxu0 0.0
  %100 = vmatprep.subr.mxu0 0.0
  %101 = vmatpush2.msra.mxu0 0.0
  %102 = vmatprep.subr.mxu0 0.0
  %103 = vmatpush2.msra.mxu0 0.0
  %104 = vmatprep.subr.mxu0 0.0
  %105 = vmatpush2.msra.mxu0 0.0
  %106 = vmatprep.subr.mxu0 0.0
  %107 = vmatpush2.msra.mxu0 0.0
  %108 = vmatprep.subr.mxu0 0.0
  %109 = vmatpush2.msra.mxu0 0.0
  %110 = vmatprep.subr.mxu0 0.0
  %111 = vmatpush2.msra.mxu0 0.0
  %112 = vmatprep.subr.mxu0 0.0
  %113 = vmatpush2.msra.mxu0 0.0
  %114 = vmatprep.subr.mxu0 0.0
  %115 = vmatpush2.msra.mxu0 0.0
  %116 = vmatprep.subr.mxu0 0.0
  %117 = vmatpush2.msra.mxu0 0.0
  %118 = vmatprep.subr.mxu0 0.0
  %119 = vmatpush2.msra.mxu0 0.0
  %120 = vmatprep.subr.mxu0 0.0
  %121 = vmatpush2.msra.mxu0 0.0
  %122 = vmatprep.mubr.f32.mxu0 0.0
  %123 = vmatmul.mubr.f32.gmra.mxu0 %v35
  %v124 = vpop.f32.mrf.mxu0
  %v125 = vadd.f32 %v31, %v124
  %v126 = vpop.f32.mrf.mxu0
  %127 = vmatprep.mubr.f32.mxu0 0.0
  %128 = vmatmul.mubr.f32.gmra.mxu0 %v38
  %v129 = vpop.f32.mrf.mxu0
  %v130 = vadd.f32 %v31, %v129
  %v131 = vpop.f32.mrf.mxu0
  %132 = vmatprep.mubr.f32.mxu0 0.0
  %133 = vmatmul.mubr.f32.gmra.mxu0 %v41
  %v134 = vpop.f32.mrf.mxu0
  %v135 = vadd.f32 %v31, %v134
  %v136 = vpop.f32.mrf.mxu0
  %137 = vmatprep.mubr.f32.mxu0 0.0
  %138 = vmatmul.mubr.f32.gmra.mxu0 %v44
  %v139 = vpop.f32.mrf.mxu0
  %v140 = vadd.f32 %v31, %v139
  %v141 = vpop.f32.mrf.mxu0
  %142 = vmatprep.mubr.f32.mxu0 0.0
  %143 = vmatmul.mubr.f32.gmra.mxu0 %v47
  %v144 = vpop.f32.mrf.mxu0
  %v145 = vadd.f32 %v31, %v144
  %v146 = vpop.f32.mrf.mxu0
  %147 = vmatprep.mubr.f32.mxu0 0.0
  %148 = vmatmul.mubr.f32.gmra.mxu0 %v50
  %v149 = vpop.f32.mrf.mxu0
  %v150 = vadd.f32 %v31, %v149
  %v151 = vpop.f32.mrf.mxu0
  %152 = vmatprep.mubr.f32.mxu0 0.0
  %153 = vmatmul.mubr.f32.gmra.mxu0 %v53
  %v154 = vpop.f32.mrf.mxu0
  %v155 = vadd.f32 %v31, %v154
  %v156 = vpop.f32.mrf.mxu0
  %157 = vmatprep.mubr.f32.mxu0 0.0
  %158 = vmatmul.mubr.f32.gmra.mxu0 %v56
  %v159 = vpop.f32.mrf.mxu0
  %v160 = vadd.f32 %v31, %v159
  %v161 = vpop.f32.mrf.mxu0
  %162 = vdwg.mxu0
  %163 = vst [vmem:[%s3] sm:$0xff] %v125
  %164 = vst [vmem:[%s3 + $0x8] sm:$0xff] %v130
  %165 = vst [vmem:[%s3 + $0x10] sm:$0xff] %v135
  %166 = vst [vmem:[%s3 + $0x18] sm:$0xff] %v140
  %167 = vst [vmem:[%s3 + $0x20] sm:$0xff] %v145
  %168 = vst [vmem:[%s3 + $0x28] sm:$0xff] %v150
  %169 = vst [vmem:[%s3 + $0x30] sm:$0xff] %v155
  %170 = vst [vmem:[%s3 + $0x38] sm:$0xff] %v160
  // Predicated region
  $region14: #{lstm_model_forward.5} parent=0 // pred_check
    _
  $region15: #{lstm_model_forward.5} parent=0 // pred_check_branch
    %172 = sbr.rel (0) target = $region17
  $region16: #{lstm_model_forward.5} parent=0 // pred_region
    _
  $region17: #{lstm_model_forward.5} parent=0 // pred_fallthru
    _
  // Predicated region
  $region18: #{lstm_model_forward.5} parent=0 // pred_check
    _
  $region19: #{lstm_model_forward.5} parent=0 // pred_check_branch
    %174 = sbr.rel (0) target = $region21
  $region20: #{lstm_model_forward.5} parent=0 // pred_region
    _
  $region21: #{lstm_model_forward.5} parent=0 // pred_fallthru
    _

// kernel: lstm_model_forward.3
$region0: #{lstm_model_forward.3}
  #allocation0 [shape = 'u32[]', space=smem, size = 0x4, offset = 0x4, fixed_abs, tag = 'smem constant byte address 0x4 - core index']
  #allocation1 [shape = 'u32[144,128]{1,0:T(1,128)}', space=vmem, size = 0x12000, scoped, tag = 'internal scratch']
  #allocation2 [shape = 'f32[8,32]{1,0:T(8,128)}', space=vmem, size = 0x1000, scoped, tag = 'scratch operand']
  #allocation3 [shape = 'f32[8,32]{1,0:T(8,128)}', space=vmem, size = 0x1000, scoped, tag = 'scratch operand']
  #allocation4 [shape = 'f32[8,8,128]{2,1,0:T(8,128)}', space=vmem, size = 0x8000, scoped, tag = 'scratch operand']
  %s0 = inlined_call_operand.vmem [shape: f32[8,8,32], index: 0, kind: input, shape index: {}]
  %s1 = inlined_call_operand.vmem [shape: f32[32,128], index: 1, kind: input, shape index: {}]
  %s2 = inlined_call_operand.vmem [shape: f32[32,128], index: 2, kind: input, shape index: {}]
  %s3 = inlined_call_operand.vmem [shape: f32[1,128], index: 3, kind: input, shape index: {}]
  %s4 = inlined_call_operand.vmem [shape: f32[8,32], index: 4, kind: input, shape index: {}]
  %s5 = inlined_call_operand.vmem [shape: f32[8,32], index: 5, kind: input, shape index: {}]
  %s6 = inlined_call_operand.vmem [shape: f32[8,8,32], index: 6, kind: output, shape index: {0}]
  %s7 = inlined_call_operand.hbm [shape: f32[8,32], index: 7, kind: output, shape index: {1}]
  %s8 = inlined_call_operand.hbm [shape: f32[8,32], index: 8, kind: output, shape index: {2}]
  %9 = xla_tuple %s6, %s7, %s8
  %s10 = sld [smem:[#allocation0]]
  $region58: #{lstm_model_forward.3} parent=0
    _
  %s12 = ssub.s32 1, %s10
  %s13 = scalar_select 0, %s12, %s10
  $region1: #{lstm_model_forward.3} parent=0
    #allocation5 [shape = 'u8[4096]{0}', space=vmem, size = 0x1000, scoped, tag = 'output window, operand 1, single buffered']
    #allocation6 [shape = 's32[1]{0}', space=sflag, size = 0x4, scoped, tag = 'scoped memory for lstm_model_forward.3']
    #allocation7 [shape = 'u8[4096]{0}', space=vmem, size = 0x1000, scoped, tag = 'output window, operand 2, single buffered']
    #allocation8 [shape = 's32[1]{0}', space=sflag, size = 0x4, scoped, tag = 'scoped memory for lstm_model_forward.3']
    %14 = vsyncpa [#allocation6], 0
    %15 = vsyncpa [#allocation8], 0
    // Predicated region
    $region2: #{lstm_model_forward.3} parent=1 // pred_check
      _
    $region3: #{lstm_model_forward.3} parent=1 // pred_check_branch
      %17 = sbr.rel (0) target = $region5
    $region4: #{lstm_model_forward.3} parent=1 // pred_region
      _
    $region5: #{lstm_model_forward.3} parent=1 // pred_fallthru
      _
    // Predicated region
    $region6: #{lstm_model_forward.3} parent=1 // pred_check
      _
    $region7: #{lstm_model_forward.3} parent=1 // pred_check_branch
      %19 = sbr.rel (0) target = $region9
    $region8: #{lstm_model_forward.3} parent=1 // pred_region
      _
    $region9: #{lstm_model_forward.3} parent=1 // pred_fallthru
      _
    // Predicated region
    $region10: #{lstm_model_forward.3} parent=1 // pred_check
      _
    $region11: #{lstm_model_forward.3} parent=1 // pred_check_branch
      %21 = sbr.rel (0) target = $region13
    $region12: #{lstm_model_forward.3} parent=1 // pred_region
      _
    $region13: #{lstm_model_forward.3} parent=1 // pred_fallthru
      _
    // Predicated region
    $region14: #{lstm_model_forward.3} parent=1 // pred_check
      _
    $region15: #{lstm_model_forward.3} parent=1 // pred_check_branch
      %23 = sbr.rel (0) target = $region17
    $region16: #{lstm_model_forward.3} parent=1 // pred_region
      _
    $region17: #{lstm_model_forward.3} parent=1 // pred_fallthru
      _
    // Predicated region
    $region18: #{lstm_model_forward.3} parent=1 // pred_check
      _
    $region19: #{lstm_model_forward.3} parent=1 // pred_check_branch
      %25 = sbr.rel (0) target = $region21
    $region20: #{lstm_model_forward.3} parent=1 // pred_region
      _
    $region21: #{lstm_model_forward.3} parent=1 // pred_fallthru
      _
    // Predicated region
    $region22: #{lstm_model_forward.3} parent=1 // pred_check
      _
    $region23: #{lstm_model_forward.3} parent=1 // pred_check_branch
      %27 = sbr.rel (0) target = $region25
    $region24: #{lstm_model_forward.3} parent=1 // pred_region
      _
    $region25: #{lstm_model_forward.3} parent=1 // pred_fallthru
      _
    %p28 = scmp.eq.s32.totalorder 0, 0
    // Predicated region
    $region26: #{lstm_model_forward.3} parent=1 // pred_check
      %p29 = pneg %p28
    $region27: #{lstm_model_forward.3} parent=1 // pred_check_branch
      %31 = sbr.rel (%p29) target = $region29
    $region28: #{lstm_model_forward.3} parent=1 // pred_region
      %v32 = vld [vmem:[%s4] sm:$0xff]
      %vm33 = vcmask 261120
      %34 = vst.msk [vmem:[#allocation2] sm:$0xff] %vm33, %v32
      %v35 = vld [vmem:[%s5] sm:$0xff]
      %36 = vst.msk [vmem:[#allocation3] sm:$0xff] %vm33, %v35
    $region29: #{lstm_model_forward.3} parent=1 // pred_fallthru
      _
    %v37 = vld [vmem:[%s0] sm:$0xff]
    %v38 = vld [vmem:[%s0 + $0x8] sm:$0xff]
    %v39 = vld [vmem:[%s0 + $0x10] sm:$0xff]
    %v40 = vld [vmem:[%s0 + $0x18] sm:$0xff]
    %v41 = vld [vmem:[%s0 + $0x20] sm:$0xff]
    %v42 = vld [vmem:[%s0 + $0x28] sm:$0xff]
    %v43 = vld [vmem:[%s0 + $0x30] sm:$0xff]
    %v44 = vld [vmem:[%s0 + $0x38] sm:$0xff]
    %v45 = vld [vmem:[%s1] sm:$0xff]
    %v46 = vld [vmem:[%s1 + $0x8] sm:$0xff]
    %v47 = vld [vmem:[%s1 + $0x10] sm:$0xff]
    %v48 = vld [vmem:[%s1 + $0x18] sm:$0xff]
    %v49 = vld [vmem:[%s3] sm:$0x1]
    %v51 = vlaneseq
    %v52 = vshrl.u32 %v51, 7
    %v53 = vsub.s32 0, %v52
    %v54 = vrot.slane %v49, %v53
    %vm56 = vcmask 261120
    %v58 = vsel %vm56, %v37, 0
    %v61 = vsel %vm56, %v38, 0
    %v64 = vsel %vm56, %v39, 0
    %v67 = vsel %vm56, %v40, 0
    %v70 = vsel %vm56, %v41, 0
    %v73 = vsel %vm56, %v42, 0
    %v76 = vsel %vm56, %v43, 0
    %v79 = vsel %vm56, %v44, 0
    %81 = vmatprep.subr.mxu0 0.0
    %82 = vmatpush1.msra.mxu0 0.0
    %83 = vmatprep.subr.mxu0 0.0
    %84 = vmatpush1.msra.mxu0 0.0
    %85 = vmatprep.subr.mxu0 0.0
    %86 = vmatpush1.msra.mxu0 0.0
    %87 = vmatprep.subr.mxu0 0.0
    %88 = vmatpush1.msra.mxu0 0.0
    %89 = vmatprep.subr.mxu0 0.0
    %90 = vmatpush1.msra.mxu0 0.0
    %91 = vmatprep.subr.mxu0 0.0
    %92 = vmatpush1.msra.mxu0 0.0
    %93 = vmatprep.subr.mxu0 0.0
    %94 = vmatpush1.msra.mxu0 0.0
    %95 = vmatprep.subr.mxu0 0.0
    %96 = vmatpush1.msra.mxu0 0.0
    %97 = vmatprep.subr.mxu0 0.0
    %98 = vmatpush1.msra.mxu0 0.0
    %99 = vmatprep.subr.mxu0 0.0
    %100 = vmatpush1.msra.mxu0 0.0
    %101 = vmatprep.subr.mxu0 0.0
    %102 = vmatpush1.msra.mxu0 0.0
    %103 = vmatprep.subr.mxu0 0.0
    %104 = vmatpush1.msra.mxu0 0.0
    %105 = vmatprep.subr.mxu0 0.0
    %106 = vmatpush1.msra.mxu0 %v48
    %107 = vmatprep.subr.mxu0 0.0
    %108 = vmatpush1.msra.mxu0 %v47
    %109 = vmatprep.subr.mxu0 0.0
    %110 = vmatpush1.msra.mxu0 %v46
    %111 = vmatprep.subr.mxu0 0.0
    %112 = vmatpush1.msra.mxu0 %v45
    %113 = vmatprep.subr.mxu0 0.0
    %114 = vmatpush2.msra.mxu0 0.0
    %115 = vmatprep.subr.mxu0 0.0
    %116 = vmatpush2.msra.mxu0 0.0
    %117 = vmatprep.subr.mxu0 0.0
    %118 = vmatpush2.msra.mxu0 0.0
    %119 = vmatprep.subr.mxu0 0.0
    %120 = vmatpush2.msra.mxu0 0.0
    %121 = vmatprep.subr.mxu0 0.0
    %122 = vmatpush2.msra.mxu0 0.0
    %123 = vmatprep.subr.mxu0 0.0
    %124 = vmatpush2.msra.mxu0 0.0
    %125 = vmatprep.subr.mxu0 0.0
    %126 = vmatpush2.msra.mxu0 0.0
    %127 = vmatprep.subr.mxu0 0.0
    %128 = vmatpush2.msra.mxu0 0.0
    %129 = vmatprep.subr.mxu0 0.0
    %130 = vmatpush2.msra.mxu0 0.0
    %131 = vmatprep.subr.mxu0 0.0
    %132 = vmatpush2.msra.mxu0 0.0
    %133 = vmatprep.subr.mxu0 0.0
    %134 = vmatpush2.msra.mxu0 0.0
    %135 = vmatprep.subr.mxu0 0.0
    %136 = vmatpush2.msra.mxu0 0.0
    %137 = vmatprep.subr.mxu0 0.0
    %138 = vmatpush2.msra.mxu0 0.0
    %139 = vmatprep.subr.mxu0 0.0
    %140 = vmatpush2.msra.mxu0 0.0
    %141 = vmatprep.subr.mxu0 0.0
    %142 = vmatpush2.msra.mxu0 0.0
    %143 = vmatprep.subr.mxu0 0.0
    %144 = vmatpush2.msra.mxu0 0.0
    %145 = vmatprep.mubr.f32.mxu0 0.0
    %146 = vmatmul.mubr.f32.gmra.mxu0 %v58
    %v147 = vpop.f32.mrf.mxu0
    %v148 = vadd.f32 %v54, %v147
    %v149 = vpop.f32.mrf.mxu0
    %150 = vmatprep.mubr.f32.mxu0 0.0
    %151 = vmatmul.mubr.f32.gmra.mxu0 %v61
    %v152 = vpop.f32.mrf.mxu0
    %v153 = vadd.f32 %v54, %v152
    %v154 = vpop.f32.mrf.mxu0
    %155 = vmatprep.mubr.f32.mxu0 0.0
    %156 = vmatmul.mubr.f32.gmra.mxu0 %v64
    %v157 = vpop.f32.mrf.mxu0
    %v158 = vadd.f32 %v54, %v157
    %v159 = vpop.f32.mrf.mxu0
    %160 = vmatprep.mubr.f32.mxu0 0.0
    %161 = vmatmul.mubr.f32.gmra.mxu0 %v67
    %v162 = vpop.f32.mrf.mxu0
    %v163 = vadd.f32 %v54, %v162
    %v164 = vpop.f32.mrf.mxu0
    %165 = vmatprep.mubr.f32.mxu0 0.0
    %166 = vmatmul.mubr.f32.gmra.mxu0 %v70
    %v167 = vpop.f32.mrf.mxu0
    %v168 = vadd.f32 %v54, %v167
    %v169 = vpop.f32.mrf.mxu0
    %170 = vmatprep.mubr.f32.mxu0 0.0
    %171 = vmatmul.mubr.f32.gmra.mxu0 %v73
    %v172 = vpop.f32.mrf.mxu0
    %v173 = vadd.f32 %v54, %v172
    %v174 = vpop.f32.mrf.mxu0
    %175 = vmatprep.mubr.f32.mxu0 0.0
    %176 = vmatmul.mubr.f32.gmra.mxu0 %v76
    %v177 = vpop.f32.mrf.mxu0
    %v178 = vadd.f32 %v54, %v177
    %v179 = vpop.f32.mrf.mxu0
    %180 = vmatprep.mubr.f32.mxu0 0.0
    %181 = vmatmul.mubr.f32.gmra.mxu0 %v79
    %v182 = vpop.f32.mrf.mxu0
    %v183 = vadd.f32 %v54, %v182
    %v184 = vpop.f32.mrf.mxu0
    %185 = vdwg.mxu0
    %186 = vst [vmem:[#allocation4] sm:$0xff] %v148
    %187 = vst [vmem:[#allocation4 + $0x8] sm:$0xff] %v153
    %188 = vst [vmem:[#allocation4 + $0x10] sm:$0xff] %v158
    %189 = vst [vmem:[#allocation4 + $0x18] sm:$0xff] %v163
    %190 = vst [vmem:[#allocation4 + $0x20] sm:$0xff] %v168
    %191 = vst [vmem:[#allocation4 + $0x28] sm:$0xff] %v173
    %192 = vst [vmem:[#allocation4 + $0x30] sm:$0xff] %v178
    %193 = vst [vmem:[#allocation4 + $0x38] sm:$0xff] %v183
    %v194 = vld [vmem:[%s2] sm:$0xff]
    %v195 = vld [vmem:[%s2 + $0x8] sm:$0xff]
    %v196 = vld [vmem:[%s2 + $0x10] sm:$0xff]
    %v197 = vld [vmem:[%s2 + $0x18] sm:$0xff]
    %v198 = vld [vmem:[#allocation2] sm:$0xff]
    %v199 = vld [vmem:[#allocation3] sm:$0xff]
    %v200 = vld [vmem:[#allocation4] sm:$0xff]
    %v202 = vsel %vm56, %v198, 0
    %204 = vmatprep.subr.mxu0 0.0
    %205 = vmatpush1.msra.mxu0 0.0
    %206 = vmatprep.subr.mxu0 0.0
    %207 = vmatpush1.msra.mxu0 0.0
    %208 = vmatprep.subr.mxu0 0.0
    %209 = vmatpush1.msra.mxu0 0.0
    %210 = vmatprep.subr.mxu0 0.0
    %211 = vmatpush1.msra.mxu0 0.0
    %212 = vmatprep.subr.mxu0 0.0
    %213 = vmatpush1.msra.mxu0 0.0
    %214 = vmatprep.subr.mxu0 0.0
    %215 = vmatpush1.msra.mxu0 0.0
    %216 = vmatprep.subr.mxu0 0.0
    %217 = vmatpush1.msra.mxu0 0.0
    %218 = vmatprep.subr.mxu0 0.0
    %219 = vmatpush1.msra.mxu0 0.0
    %220 = vmatprep.subr.mxu0 0.0
    %221 = vmatpush1.msra.mxu0 0.0
    %222 = vmatprep.subr.mxu0 0.0
    %223 = vmatpush1.msra.mxu0 0.0
    %224 = vmatprep.subr.mxu0 0.0
    %225 = vmatpush1.msra.mxu0 0.0
    %226 = vmatprep.subr.mxu0 0.0
    %227 = vmatpush1.msra.mxu0 0.0
    %228 = vmatprep.subr.mxu0 0.0
    %229 = vmatpush1.msra.mxu0 %v197
    %230 = vmatprep.subr.mxu0 0.0
    %231 = vmatpush1.msra.mxu0 %v196
    %232 = vmatprep.subr.mxu0 0.0
    %233 = vmatpush1.msra.mxu0 %v195
    %234 = vmatprep.subr.mxu0 0.0
    %235 = vmatpush1.msra.mxu0 %v194
    %236 = vmatprep.subr.mxu0 0.0
    %237 = vmatpush2.msra.mxu0 0.0
    %238 = vmatprep.subr.mxu0 0.0
    %239 = vmatpush2.msra.mxu0 0.0
    %240 = vmatprep.subr.mxu0 0.0
    %241 = vmatpush2.msra.mxu0 0.0
    %242 = vmatprep.subr.mxu0 0.0
    %243 = vmatpush2.msra.mxu0 0.0
    %244 = vmatprep.subr.mxu0 0.0
    %245 = vmatpush2.msra.mxu0 0.0
    %246 = vmatprep.subr.mxu0 0.0
    %247 = vmatpush2.msra.mxu0 0.0
    %248 = vmatprep.subr.mxu0 0.0
    %249 = vmatpush2.msra.mxu0 0.0
    %250 = vmatprep.subr.mxu0 0.0
    %251 = vmatpush2.msra.mxu0 0.0
    %252 = vmatprep.subr.mxu0 0.0
    %253 = vmatpush2.msra.mxu0 0.0
    %254 = vmatprep.subr.mxu0 0.0
    %255 = vmatpush2.msra.mxu0 0.0
    %256 = vmatprep.subr.mxu0 0.0
    %257 = vmatpush2.msra.mxu0 0.0
    %258 = vmatprep.subr.mxu0 0.0
    %259 = vmatpush2.msra.mxu0 0.0
    %260 = vmatprep.subr.mxu0 0.0
    %261 = vmatpush2.msra.mxu0 0.0
    %262 = vmatprep.subr.mxu0 0.0
    %263 = vmatpush2.msra.mxu0 0.0
    %264 = vmatprep.subr.mxu0 0.0
    %265 = vmatpush2.msra.mxu0 0.0
    %266 = vmatprep.subr.mxu0 0.0
    %267 = vmatpush2.msra.mxu0 0.0
    %268 = vmatprep.mubr.f32.mxu0 0.0
    %269 = vmatmul.mubr.f32.gmra.mxu0 %v202
    %v270 = vpop.f32.mrf.mxu0
    %v271 = vadd.f32 0.0, %v270
    %v272 = vpop.f32.mrf.mxu0
    %273 = vdwg.mxu0
    %v274 = vadd.f32 %v200, %v271
    %v275 = vxor.u32 %v274, 2147483648
    %v276 = vmul.f32 %v275, 1.442695
    %v277 = vpow.pop %v276
    %v278 = vadd.f32 %v277, 1.0
    %v279 = vrcp.pop %v278
    %v280 = vmul.f32 1.0, %v279
    %v281 = vtanh.pop %v274
    %283 = vrot.lane.b32.xlu0 %v199, 32
    %v284 = vpop.permute.xlu0 %283
    %v286 = vmul.f32 %v280, %v284
    %288 = vrot.lane.b32.xlu0 %v281, 32
    %v289 = vpop.permute.xlu0 %288
    %v291 = vmul.f32 %v280, %v289
    %293 = vrot.lane.b32.xlu0 %v291, 32
    %v294 = vpop.permute.xlu0 %293
    %v296 = vadd.f32 %v286, %v294
    %v297 = vtanh.pop %v296
    %299 = vrot.lane.b32.xlu0 %v297, 32
    %v300 = vpop.permute.xlu0 %299
    %v302 = vmul.f32 %v280, %v300
    %304 = vrot.lane.b32.xlu0 %v302, 64
    %v305 = vpop.permute.xlu0 %304
    %307 = vst.msk [vmem:[%s6] sm:$0xff] %vm56, %v305
    %s308 = scalar_lea.vmem [#allocation4], 8
    %v309 = vld [vmem:[%s308] sm:$0xff]
    %v310 = vsel %vm56, %v305, 0
    %312 = vmatprep.subr.mxu0 0.0
    %313 = vmatpush1.msra.mxu0 0.0
    %314 = vmatprep.subr.mxu0 0.0
    %315 = vmatpush1.msra.mxu0 0.0
    %316 = vmatprep.subr.mxu0 0.0
    %317 = vmatpush1.msra.mxu0 0.0
    %318 = vmatprep.subr.mxu0 0.0
    %319 = vmatpush1.msra.mxu0 0.0
    %320 = vmatprep.subr.mxu0 0.0
    %321 = vmatpush1.msra.mxu0 0.0
    %322 = vmatprep.subr.mxu0 0.0
    %323 = vmatpush1.msra.mxu0 0.0
    %324 = vmatprep.subr.mxu0 0.0
    %325 = vmatpush1.msra.mxu0 0.0
    %326 = vmatprep.subr.mxu0 0.0
    %327 = vmatpush1.msra.mxu0 0.0
    %328 = vmatprep.subr.mxu0 0.0
    %329 = vmatpush1.msra.mxu0 0.0
    %330 = vmatprep.subr.mxu0 0.0
    %331 = vmatpush1.msra.mxu0 0.0
    %332 = vmatprep.subr.mxu0 0.0
    %333 = vmatpush1.msra.mxu0 0.0
    %334 = vmatprep.subr.mxu0 0.0
    %335 = vmatpush1.msra.mxu0 0.0
    %336 = vmatprep.subr.mxu0 0.0
    %337 = vmatpush1.msra.mxu0 %v197
    %338 = vmatprep.subr.mxu0 0.0
    %339 = vmatpush1.msra.mxu0 %v196
    %340 = vmatprep.subr.mxu0 0.0
    %341 = vmatpush1.msra.mxu0 %v195
    %342 = vmatprep.subr.mxu0 0.0
    %343 = vmatpush1.msra.mxu0 %v194
    %344 = vmatprep.subr.mxu0 0.0
    %345 = vmatpush2.msra.mxu0 0.0
    %346 = vmatprep.subr.mxu0 0.0
    %347 = vmatpush2.msra.mxu0 0.0
    %348 = vmatprep.subr.mxu0 0.0
    %349 = vmatpush2.msra.mxu0 0.0
    %350 = vmatprep.subr.mxu0 0.0
    %351 = vmatpush2.msra.mxu0 0.0
    %352 = vmatprep.subr.mxu0 0.0
    %353 = vmatpush2.msra.mxu0 0.0
    %354 = vmatprep.subr.mxu0 0.0
    %355 = vmatpush2.msra.mxu0 0.0
    %356 = vmatprep.subr.mxu0 0.0
    %357 = vmatpush2.msra.mxu0 0.0
    %358 = vmatprep.subr.mxu0 0.0
    %359 = vmatpush2.msra.mxu0 0.0
    %360 = vmatprep.subr.mxu0 0.0
    %361 = vmatpush2.msra.mxu0 0.0
    %362 = vmatprep.subr.mxu0 0.0
    %363 = vmatpush2.msra.mxu0 0.0
    %364 = vmatprep.subr.mxu0 0.0
    %365 = vmatpush2.msra.mxu0 0.0
    %366 = vmatprep.subr.mxu0 0.0
    %367 = vmatpush2.msra.mxu0 0.0
    %368 = vmatprep.subr.mxu0 0.0
    %369 = vmatpush2.msra.mxu0 0.0
    %370 = vmatprep.subr.mxu0 0.0
    %371 = vmatpush2.msra.mxu0 0.0
    %372 = vmatprep.subr.mxu0 0.0
    %373 = vmatpush2.msra.mxu0 0.0
    %374 = vmatprep.subr.mxu0 0.0
    %375 = vmatpush2.msra.mxu0 0.0
    %376 = vmatprep.mubr.f32.mxu0 0.0
    %377 = vmatmul.mubr.f32.gmra.mxu0 %v310
    %v378 = vpop.f32.mrf.mxu0
    %v379 = vadd.f32 0.0, %v378
    %v380 = vpop.f32.mrf.mxu0
    %381 = vdwg.mxu0
    %v382 = vadd.f32 %v309, %v379
    %v383 = vxor.u32 %v382, 2147483648
    %v384 = vmul.f32 %v383, 1.442695
    %v385 = vpow.pop %v384
    %v386 = vadd.f32 %v385, 1.0
    %v387 = vrcp.pop %v386
    %v388 = vmul.f32 1.0, %v387
    %v389 = vtanh.pop %v382
    %v390 = vmul.f32 %v388, %v296
    %392 = vrot.lane.b32.xlu0 %v389, 32
    %v393 = vpop.permute.xlu0 %392
    %v395 = vmul.f32 %v388, %v393
    %397 = vrot.lane.b32.xlu0 %v395, 32
    %v398 = vpop.permute.xlu0 %397
    %v400 = vadd.f32 %v390, %v398
    %v401 = vtanh.pop %v400
    %403 = vrot.lane.b32.xlu0 %v401, 32
    %v404 = vpop.permute.xlu0 %403
    %v406 = vmul.f32 %v388, %v404
    %408 = vrot.lane.b32.xlu0 %v406, 64
    %v409 = vpop.permute.xlu0 %408
    %s411 = scalar_lea.vmem %s6, 8
    %412 = vst.msk [vmem:[%s411] sm:$0xff] %vm56, %v409
    %s413 = scalar_lea.vmem [#allocation4], 16
    %v414 = vld [vmem:[%s413] sm:$0xff]
    %v415 = vsel %vm56, %v409, 0
    %417 = vmatprep.subr.mxu0 0.0
    %418 = vmatpush1.msra.mxu0 0.0
    %419 = vmatprep.subr.mxu0 0.0
    %420 = vmatpush1.msra.mxu0 0.0
    %421 = vmatprep.subr.mxu0 0.0
    %422 = vmatpush1.msra.mxu0 0.0
    %423 = vmatprep.subr.mxu0 0.0
    %424 = vmatpush1.msra.mxu0 0.0
    %425 = vmatprep.subr.mxu0 0.0
    %426 = vmatpush1.msra.mxu0 0.0
    %427 = vmatprep.subr.mxu0 0.0
    %428 = vmatpush1.msra.mxu0 0.0
    %429 = vmatprep.subr.mxu0 0.0
    %430 = vmatpush1.msra.mxu0 0.0
    %431 = vmatprep.subr.mxu0 0.0
    %432 = vmatpush1.msra.mxu0 0.0
    %433 = vmatprep.subr.mxu0 0.0
    %434 = vmatpush1.msra.mxu0 0.0
    %435 = vmatprep.subr.mxu0 0.0
    %436 = vmatpush1.msra.mxu0 0.0
    %437 = vmatprep.subr.mxu0 0.0
    %438 = vmatpush1.msra.mxu0 0.0
    %439 = vmatprep.subr.mxu0 0.0
    %440 = vmatpush1.msra.mxu0 0.0
    %441 = vmatprep.subr.mxu0 0.0
    %442 = vmatpush1.msra.mxu0 %v197
    %443 = vmatprep.subr.mxu0 0.0
    %444 = vmatpush1.msra.mxu0 %v196
    %445 = vmatprep.subr.mxu0 0.0
    %446 = vmatpush1.msra.mxu0 %v195
    %447 = vmatprep.subr.mxu0 0.0
    %448 = vmatpush1.msra.mxu0 %v194
    %449 = vmatprep.subr.mxu0 0.0
    %450 = vmatpush2.msra.mxu0 0.0
    %451 = vmatprep.subr.mxu0 0.0
    %452 = vmatpush2.msra.mxu0 0.0
    %453 = vmatprep.subr.mxu0 0.0
    %454 = vmatpush2.msra.mxu0 0.0
    %455 = vmatprep.subr.mxu0 0.0
    %456 = vmatpush2.msra.mxu0 0.0
    %457 = vmatprep.subr.mxu0 0.0
    %458 = vmatpush2.msra.mxu0 0.0
    %459 = vmatprep.subr.mxu0 0.0
    %460 = vmatpush2.msra.mxu0 0.0
    %461 = vmatprep.subr.mxu0 0.0
    %462 = vmatpush2.msra.mxu0 0.0
    %463 = vmatprep.subr.mxu0 0.0
    %464 = vmatpush2.msra.mxu0 0.0
    %465 = vmatprep.subr.mxu0 0.0
    %466 = vmatpush2.msra.mxu0 0.0
    %467 = vmatprep.subr.mxu0 0.0
    %468 = vmatpush2.msra.mxu0 0.0
    %469 = vmatprep.subr.mxu0 0.0
    %470 = vmatpush2.msra.mxu0 0.0
    %471 = vmatprep.subr.mxu0 0.0
    %472 = vmatpush2.msra.mxu0 0.0
    %473 = vmatprep.subr.mxu0 0.0
    %474 = vmatpush2.msra.mxu0 0.0
    %475 = vmatprep.subr.mxu0 0.0
    %476 = vmatpush2.msra.mxu0 0.0
    %477 = vmatprep.subr.mxu0 0.0
    %478 = vmatpush2.msra.mxu0 0.0
    %479 = vmatprep.subr.mxu0 0.0
    %480 = vmatpush2.msra.mxu0 0.0
    %481 = vmatprep.mubr.f32.mxu0 0.0
    %482 = vmatmul.mubr.f32.gmra.mxu0 %v415
    %v483 = vpop.f32.mrf.mxu0
    %v484 = vadd.f32 0.0, %v483
    %v485 = vpop.f32.mrf.mxu0
    %486 = vdwg.mxu0
    %v487 = vadd.f32 %v414, %v484
    %v488 = vxor.u32 %v487, 2147483648
    %v489 = vmul.f32 %v488, 1.442695
    %v490 = vpow.pop %v489
    %v491 = vadd.f32 %v490, 1.0
    %v492 = vrcp.pop %v491
    %v493 = vmul.f32 1.0, %v492
    %v494 = vtanh.pop %v487
    %v495 = vmul.f32 %v493, %v400
    %497 = vrot.lane.b32.xlu0 %v494, 32
    %v498 = vpop.permute.xlu0 %497
    %v500 = vmul.f32 %v493, %v498
    %502 = vrot.lane.b32.xlu0 %v500, 32
    %v503 = vpop.permute.xlu0 %502
    %v505 = vadd.f32 %v495, %v503
    %v506 = vtanh.pop %v505
    %508 = vrot.lane.b32.xlu0 %v506, 32
    %v509 = vpop.permute.xlu0 %508
    %v511 = vmul.f32 %v493, %v509
    %513 = vrot.lane.b32.xlu0 %v511, 64
    %v514 = vpop.permute.xlu0 %513
    %s516 = scalar_lea.vmem %s6, 16
    %517 = vst.msk [vmem:[%s516] sm:$0xff] %vm56, %v514
    %s518 = scalar_lea.vmem [#allocation4], 24
    %v519 = vld [vmem:[%s518] sm:$0xff]
    %v520 = vsel %vm56, %v514, 0
    %522 = vmatprep.subr.mxu0 0.0
    %523 = vmatpush1.msra.mxu0 0.0
    %524 = vmatprep.subr.mxu0 0.0
    %525 = vmatpush1.msra.mxu0 0.0
    %526 = vmatprep.subr.mxu0 0.0
    %527 = vmatpush1.msra.mxu0 0.0
    %528 = vmatprep.subr.mxu0 0.0
    %529 = vmatpush1.msra.mxu0 0.0
    %530 = vmatprep.subr.mxu0 0.0
    %531 = vmatpush1.msra.mxu0 0.0
    %532 = vmatprep.subr.mxu0 0.0
    %533 = vmatpush1.msra.mxu0 0.0
    %534 = vmatprep.subr.mxu0 0.0
    %535 = vmatpush1.msra.mxu0 0.0
    %536 = vmatprep.subr.mxu0 0.0
    %537 = vmatpush1.msra.mxu0 0.0
    %538 = vmatprep.subr.mxu0 0.0
    %539 = vmatpush1.msra.mxu0 0.0
    %540 = vmatprep.subr.mxu0 0.0
    %541 = vmatpush1.msra.mxu0 0.0
    %542 = vmatprep.subr.mxu0 0.0
    %543 = vmatpush1.msra.mxu0 0.0
    %544 = vmatprep.subr.mxu0 0.0
    %545 = vmatpush1.msra.mxu0 0.0
    %546 = vmatprep.subr.mxu0 0.0
    %547 = vmatpush1.msra.mxu0 %v197
    %548 = vmatprep.subr.mxu0 0.0
    %549 = vmatpush1.msra.mxu0 %v196
    %550 = vmatprep.subr.mxu0 0.0
    %551 = vmatpush1.msra.mxu0 %v195
    %552 = vmatprep.subr.mxu0 0.0
    %553 = vmatpush1.msra.mxu0 %v194
    %554 = vmatprep.subr.mxu0 0.0
    %555 = vmatpush2.msra.mxu0 0.0
    %556 = vmatprep.subr.mxu0 0.0
    %557 = vmatpush2.msra.mxu0 0.0
    %558 = vmatprep.subr.mxu0 0.0
    %559 = vmatpush2.msra.mxu0 0.0
    %560 = vmatprep.subr.mxu0 0.0
    %561 = vmatpush2.msra.mxu0 0.0
    %562 = vmatprep.subr.mxu0 0.0
    %563 = vmatpush2.msra.mxu0 0.0
    %564 = vmatprep.subr.mxu0 0.0
    %565 = vmatpush2.msra.mxu0 0.0
    %566 = vmatprep.subr.mxu0 0.0
    %567 = vmatpush2.msra.mxu0 0.0
    %568 = vmatprep.subr.mxu0 0.0
    %569 = vmatpush2.msra.mxu0 0.0
    %570 = vmatprep.subr.mxu0 0.0
    %571 = vmatpush2.msra.mxu0 0.0
    %572 = vmatprep.subr.mxu0 0.0
    %573 = vmatpush2.msra.mxu0 0.0
    %574 = vmatprep.subr.mxu0 0.0
    %575 = vmatpush2.msra.mxu0 0.0
    %576 = vmatprep.subr.mxu0 0.0
    %577 = vmatpush2.msra.mxu0 0.0
    %578 = vmatprep.subr.mxu0 0.0
    %579 = vmatpush2.msra.mxu0 0.0
    %580 = vmatprep.subr.mxu0 0.0
    %581 = vmatpush2.msra.mxu0 0.0
    %582 = vmatprep.subr.mxu0 0.0
    %583 = vmatpush2.msra.mxu0 0.0
    %584 = vmatprep.subr.mxu0 0.0
    %585 = vmatpush2.msra.mxu0 0.0
    %586 = vmatprep.mubr.f32.mxu0 0.0
    %587 = vmatmul.mubr.f32.gmra.mxu0 %v520
    %v588 = vpop.f32.mrf.mxu0
    %v589 = vadd.f32 0.0, %v588
    %v590 = vpop.f32.mrf.mxu0
    %591 = vdwg.mxu0
    %v592 = vadd.f32 %v519, %v589
    %v593 = vxor.u32 %v592, 2147483648
    %v594 = vmul.f32 %v593, 1.442695
    %v595 = vpow.pop %v594
    %v596 = vadd.f32 %v595, 1.0
    %v597 = vrcp.pop %v596
    %v598 = vmul.f32 1.0, %v597
    %v599 = vtanh.pop %v592
    %v600 = vmul.f32 %v598, %v505
    %602 = vrot.lane.b32.xlu0 %v599, 32
    %v603 = vpop.permute.xlu0 %602
    %v605 = vmul.f32 %v598, %v603
    %607 = vrot.lane.b32.xlu0 %v605, 32
    %v608 = vpop.permute.xlu0 %607
    %v610 = vadd.f32 %v600, %v608
    %v611 = vtanh.pop %v610
    %613 = vrot.lane.b32.xlu0 %v611, 32
    %v614 = vpop.permute.xlu0 %613
    %v616 = vmul.f32 %v598, %v614
    %618 = vrot.lane.b32.xlu0 %v616, 64
    %v619 = vpop.permute.xlu0 %618
    %s621 = scalar_lea.vmem %s6, 24
    %622 = vst.msk [vmem:[%s621] sm:$0xff] %vm56, %v619
    %s623 = scalar_lea.vmem [#allocation4], 32
    %v624 = vld [vmem:[%s623] sm:$0xff]
    %v625 = vsel %vm56, %v619, 0
    %627 = vmatprep.subr.mxu0 0.0
    %628 = vmatpush1.msra.mxu0 0.0
    %629 = vmatprep.subr.mxu0 0.0
    %630 = vmatpush1.msra.mxu0 0.0
    %631 = vmatprep.subr.mxu0 0.0
    %632 = vmatpush1.msra.mxu0 0.0
    %633 = vmatprep.subr.mxu0 0.0
    %634 = vmatpush1.msra.mxu0 0.0
    %635 = vmatprep.subr.mxu0 0.0
    %636 = vmatpush1.msra.mxu0 0.0
    %637 = vmatprep.subr.mxu0 0.0
    %638 = vmatpush1.msra.mxu0 0.0
    %639 = vmatprep.subr.mxu0 0.0
    %640 = vmatpush1.msra.mxu0 0.0
    %641 = vmatprep.subr.mxu0 0.0
    %642 = vmatpush1.msra.mxu0 0.0
    %643 = vmatprep.subr.mxu0 0.0
    %644 = vmatpush1.msra.mxu0 0.0
    %645 = vmatprep.subr.mxu0 0.0
    %646 = vmatpush1.msra.mxu0 0.0
    %647 = vmatprep.subr.mxu0 0.0
    %648 = vmatpush1.msra.mxu0 0.0
    %649 = vmatprep.subr.mxu0 0.0
    %650 = vmatpush1.msra.mxu0 0.0
    %651 = vmatprep.subr.mxu0 0.0
    %652 = vmatpush1.msra.mxu0 %v197
    %653 = vmatprep.subr.mxu0 0.0
    %654 = vmatpush1.msra.mxu0 %v196
    %655 = vmatprep.subr.mxu0 0.0
    %656 = vmatpush1.msra.mxu0 %v195
    %657 = vmatprep.subr.mxu0 0.0
    %658 = vmatpush1.msra.mxu0 %v194
    %659 = vmatprep.subr.mxu0 0.0
    %660 = vmatpush2.msra.mxu0 0.0
    %661 = vmatprep.subr.mxu0 0.0
    %662 = vmatpush2.msra.mxu0 0.0
    %663 = vmatprep.subr.mxu0 0.0
    %664 = vmatpush2.msra.mxu0 0.0
    %665 = vmatprep.subr.mxu0 0.0
    %666 = vmatpush2.msra.mxu0 0.0
    %667 = vmatprep.subr.mxu0 0.0
    %668 = vmatpush2.msra.mxu0 0.0
    %669 = vmatprep.subr.mxu0 0.0
    %670 = vmatpush2.msra.mxu0 0.0
    %671 = vmatprep.subr.mxu0 0.0
    %672 = vmatpush2.msra.mxu0 0.0
    %673 = vmatprep.subr.mxu0 0.0
    %674 = vmatpush2.msra.mxu0 0.0
    %675 = vmatprep.subr.mxu0 0.0
    %676 = vmatpush2.msra.mxu0 0.0
    %677 = vmatprep.subr.mxu0 0.0
    %678 = vmatpush2.msra.mxu0 0.0
    %679 = vmatprep.subr.mxu0 0.0
    %680 = vmatpush2.msra.mxu0 0.0
    %681 = vmatprep.subr.mxu0 0.0
    %682 = vmatpush2.msra.mxu0 0.0
    %683 = vmatprep.subr.mxu0 0.0
    %684 = vmatpush2.msra.mxu0 0.0
    %685 = vmatprep.subr.mxu0 0.0
    %686 = vmatpush2.msra.mxu0 0.0
    %687 = vmatprep.subr.mxu0 0.0
    %688 = vmatpush2.msra.mxu0 0.0
    %689 = vmatprep.subr.mxu0 0.0
    %690 = vmatpush2.msra.mxu0 0.0
    %691 = vmatprep.mubr.f32.mxu0 0.0
    %692 = vmatmul.mubr.f32.gmra.mxu0 %v625
    %v693 = vpop.f32.mrf.mxu0
    %v694 = vadd.f32 0.0, %v693
    %v695 = vpop.f32.mrf.mxu0
    %696 = vdwg.mxu0
    %v697 = vadd.f32 %v624, %v694
    %v698 = vxor.u32 %v697, 2147483648
    %v699 = vmul.f32 %v698, 1.442695
    %v700 = vpow.pop %v699
    %v701 = vadd.f32 %v700, 1.0
    %v702 = vrcp.pop %v701
    %v703 = vmul.f32 1.0, %v702
    %v704 = vtanh.pop %v697
    %v705 = vmul.f32 %v703, %v610
    %707 = vrot.lane.b32.xlu0 %v704, 32
    %v708 = vpop.permute.xlu0 %707
    %v710 = vmul.f32 %v703, %v708
    %712 = vrot.lane.b32.xlu0 %v710, 32
    %v713 = vpop.permute.xlu0 %712
    %v715 = vadd.f32 %v705, %v713
    %v716 = vtanh.pop %v715
    %718 = vrot.lane.b32.xlu0 %v716, 32
    %v719 = vpop.permute.xlu0 %718
    %v721 = vmul.f32 %v703, %v719
    %723 = vrot.lane.b32.xlu0 %v721, 64
    %v724 = vpop.permute.xlu0 %723
    %s726 = scalar_lea.vmem %s6, 32
    %727 = vst.msk [vmem:[%s726] sm:$0xff] %vm56, %v724
    %s728 = scalar_lea.vmem [#allocation4], 40
    %v729 = vld [vmem:[%s728] sm:$0xff]
    %v730 = vsel %vm56, %v724, 0
    %732 = vmatprep.subr.mxu0 0.0
    %733 = vmatpush1.msra.mxu0 0.0
    %734 = vmatprep.subr.mxu0 0.0
    %735 = vmatpush1.msra.mxu0 0.0
    %736 = vmatprep.subr.mxu0 0.0
    %737 = vmatpush1.msra.mxu0 0.0
    %738 = vmatprep.subr.mxu0 0.0
    %739 = vmatpush1.msra.mxu0 0.0
    %740 = vmatprep.subr.mxu0 0.0
    %741 = vmatpush1.msra.mxu0 0.0
    %742 = vmatprep.subr.mxu0 0.0
    %743 = vmatpush1.msra.mxu0 0.0
    %744 = vmatprep.subr.mxu0 0.0
    %745 = vmatpush1.msra.mxu0 0.0
    %746 = vmatprep.subr.mxu0 0.0
    %747 = vmatpush1.msra.mxu0 0.0
    %748 = vmatprep.subr.mxu0 0.0
    %749 = vmatpush1.msra.mxu0 0.0
    %750 = vmatprep.subr.mxu0 0.0
    %751 = vmatpush1.msra.mxu0 0.0
    %752 = vmatprep.subr.mxu0 0.0
    %753 = vmatpush1.msra.mxu0 0.0
    %754 = vmatprep.subr.mxu0 0.0
    %755 = vmatpush1.msra.mxu0 0.0
    %756 = vmatprep.subr.mxu0 0.0
    %757 = vmatpush1.msra.mxu0 %v197
    %758 = vmatprep.subr.mxu0 0.0
    %759 = vmatpush1.msra.mxu0 %v196
    %760 = vmatprep.subr.mxu0 0.0
    %761 = vmatpush1.msra.mxu0 %v195
    %762 = vmatprep.subr.mxu0 0.0
    %763 = vmatpush1.msra.mxu0 %v194
    %764 = vmatprep.subr.mxu0 0.0
    %765 = vmatpush2.msra.mxu0 0.0
    %766 = vmatprep.subr.mxu0 0.0
    %767 = vmatpush2.msra.mxu0 0.0
    %768 = vmatprep.subr.mxu0 0.0
    %769 = vmatpush2.msra.mxu0 0.0
    %770 = vmatprep.subr.mxu0 0.0
    %771 = vmatpush2.msra.mxu0 0.0
    %772 = vmatprep.subr.mxu0 0.0
    %773 = vmatpush2.msra.mxu0 0.0
    %774 = vmatprep.subr.mxu0 0.0
    %775 = vmatpush2.msra.mxu0 0.0
    %776 = vmatprep.subr.mxu0 0.0
    %777 = vmatpush2.msra.mxu0 0.0
    %778 = vmatprep.subr.mxu0 0.0
    %779 = vmatpush2.msra.mxu0 0.0
    %780 = vmatprep.subr.mxu0 0.0
    %781 = vmatpush2.msra.mxu0 0.0
    %782 = vmatprep.subr.mxu0 0.0
    %783 = vmatpush2.msra.mxu0 0.0
    %784 = vmatprep.subr.mxu0 0.0
    %785 = vmatpush2.msra.mxu0 0.0
    %786 = vmatprep.subr.mxu0 0.0
    %787 = vmatpush2.msra.mxu0 0.0
    %788 = vmatprep.subr.mxu0 0.0
    %789 = vmatpush2.msra.mxu0 0.0
    %790 = vmatprep.subr.mxu0 0.0
    %791 = vmatpush2.msra.mxu0 0.0
    %792 = vmatprep.subr.mxu0 0.0
    %793 = vmatpush2.msra.mxu0 0.0
    %794 = vmatprep.subr.mxu0 0.0
    %795 = vmatpush2.msra.mxu0 0.0
    %796 = vmatprep.mubr.f32.mxu0 0.0
    %797 = vmatmul.mubr.f32.gmra.mxu0 %v730
    %v798 = vpop.f32.mrf.mxu0
    %v799 = vadd.f32 0.0, %v798
    %v800 = vpop.f32.mrf.mxu0
    %801 = vdwg.mxu0
    %v802 = vadd.f32 %v729, %v799
    %v803 = vxor.u32 %v802, 2147483648
    %v804 = vmul.f32 %v803, 1.442695
    %v805 = vpow.pop %v804
    %v806 = vadd.f32 %v805, 1.0
    %v807 = vrcp.pop %v806
    %v808 = vmul.f32 1.0, %v807
    %v809 = vtanh.pop %v802
    %v810 = vmul.f32 %v808, %v715
    %812 = vrot.lane.b32.xlu0 %v809, 32
    %v813 = vpop.permute.xlu0 %812
    %v815 = vmul.f32 %v808, %v813
    %817 = vrot.lane.b32.xlu0 %v815, 32
    %v818 = vpop.permute.xlu0 %817
    %v820 = vadd.f32 %v810, %v818
    %v821 = vtanh.pop %v820
    %823 = vrot.lane.b32.xlu0 %v821, 32
    %v824 = vpop.permute.xlu0 %823
    %v826 = vmul.f32 %v808, %v824
    %828 = vrot.lane.b32.xlu0 %v826, 64
    %v829 = vpop.permute.xlu0 %828
    %s831 = scalar_lea.vmem %s6, 40
    %832 = vst.msk [vmem:[%s831] sm:$0xff] %vm56, %v829
    %s833 = scalar_lea.vmem [#allocation4], 48
    %v834 = vld [vmem:[%s833] sm:$0xff]
    %v835 = vsel %vm56, %v829, 0
    %837 = vmatprep.subr.mxu0 0.0
    %838 = vmatpush1.msra.mxu0 0.0
    %839 = vmatprep.subr.mxu0 0.0
    %840 = vmatpush1.msra.mxu0 0.0
    %841 = vmatprep.subr.mxu0 0.0
    %842 = vmatpush1.msra.mxu0 0.0
    %843 = vmatprep.subr.mxu0 0.0
    %844 = vmatpush1.msra.mxu0 0.0
    %845 = vmatprep.subr.mxu0 0.0
    %846 = vmatpush1.msra.mxu0 0.0
    %847 = vmatprep.subr.mxu0 0.0
    %848 = vmatpush1.msra.mxu0 0.0
    %849 = vmatprep.subr.mxu0 0.0
    %850 = vmatpush1.msra.mxu0 0.0
    %851 = vmatprep.subr.mxu0 0.0
    %852 = vmatpush1.msra.mxu0 0.0
    %853 = vmatprep.subr.mxu0 0.0
    %854 = vmatpush1.msra.mxu0 0.0
    %855 = vmatprep.subr.mxu0 0.0
    %856 = vmatpush1.msra.mxu0 0.0
    %857 = vmatprep.subr.mxu0 0.0
    %858 = vmatpush1.msra.mxu0 0.0
    %859 = vmatprep.subr.mxu0 0.0
    %860 = vmatpush1.msra.mxu0 0.0
    %861 = vmatprep.subr.mxu0 0.0
    %862 = vmatpush1.msra.mxu0 %v197
    %863 = vmatprep.subr.mxu0 0.0
    %864 = vmatpush1.msra.mxu0 %v196
    %865 = vmatprep.subr.mxu0 0.0
    %866 = vmatpush1.msra.mxu0 %v195
    %867 = vmatprep.subr.mxu0 0.0
    %868 = vmatpush1.msra.mxu0 %v194
    %869 = vmatprep.subr.mxu0 0.0
    %870 = vmatpush2.msra.mxu0 0.0
    %871 = vmatprep.subr.mxu0 0.0
    %872 = vmatpush2.msra.mxu0 0.0
    %873 = vmatprep.subr.mxu0 0.0
    %874 = vmatpush2.msra.mxu0 0.0
    %875 = vmatprep.subr.mxu0 0.0
    %876 = vmatpush2.msra.mxu0 0.0
    %877 = vmatprep.subr.mxu0 0.0
    %878 = vmatpush2.msra.mxu0 0.0
    %879 = vmatprep.subr.mxu0 0.0
    %880 = vmatpush2.msra.mxu0 0.0
    %881 = vmatprep.subr.mxu0 0.0
    %882 = vmatpush2.msra.mxu0 0.0
    %883 = vmatprep.subr.mxu0 0.0
    %884 = vmatpush2.msra.mxu0 0.0
    %885 = vmatprep.subr.mxu0 0.0
    %886 = vmatpush2.msra.mxu0 0.0
    %887 = vmatprep.subr.mxu0 0.0
    %888 = vmatpush2.msra.mxu0 0.0
    %889 = vmatprep.subr.mxu0 0.0
    %890 = vmatpush2.msra.mxu0 0.0
    %891 = vmatprep.subr.mxu0 0.0
    %892 = vmatpush2.msra.mxu0 0.0
    %893 = vmatprep.subr.mxu0 0.0
    %894 = vmatpush2.msra.mxu0 0.0
    %895 = vmatprep.subr.mxu0 0.0
    %896 = vmatpush2.msra.mxu0 0.0
    %897 = vmatprep.subr.mxu0 0.0
    %898 = vmatpush2.msra.mxu0 0.0
    %899 = vmatprep.subr.mxu0 0.0
    %900 = vmatpush2.msra.mxu0 0.0
    %901 = vmatprep.mubr.f32.mxu0 0.0
    %902 = vmatmul.mubr.f32.gmra.mxu0 %v835
    %v903 = vpop.f32.mrf.mxu0
    %v904 = vadd.f32 0.0, %v903
    %v905 = vpop.f32.mrf.mxu0
    %906 = vdwg.mxu0
    %v907 = vadd.f32 %v834, %v904
    %v908 = vxor.u32 %v907, 2147483648
    %v909 = vmul.f32 %v908, 1.442695
    %v910 = vpow.pop %v909
    %v911 = vadd.f32 %v910, 1.0
    %v912 = vrcp.pop %v911
    %v913 = vmul.f32 1.0, %v912
    %v914 = vtanh.pop %v907
    %v915 = vmul.f32 %v913, %v820
    %917 = vrot.lane.b32.xlu0 %v914, 32
    %v918 = vpop.permute.xlu0 %917
    %v920 = vmul.f32 %v913, %v918
    %922 = vrot.lane.b32.xlu0 %v920, 32
    %v923 = vpop.permute.xlu0 %922
    %v925 = vadd.f32 %v915, %v923
    %v926 = vtanh.pop %v925
    %928 = vrot.lane.b32.xlu0 %v926, 32
    %v929 = vpop.permute.xlu0 %928
    %v931 = vmul.f32 %v913, %v929
    %933 = vrot.lane.b32.xlu0 %v931, 64
    %v934 = vpop.permute.xlu0 %933
    %s936 = scalar_lea.vmem %s6, 48
    %937 = vst.msk [vmem:[%s936] sm:$0xff] %vm56, %v934
    %s938 = scalar_lea.vmem [#allocation4], 56
    %v939 = vld [vmem:[%s938] sm:$0xff]
    %v940 = vsel %vm56, %v934, 0
    %942 = vmatprep.subr.mxu0 0.0
    %943 = vmatpush1.msra.mxu0 0.0
    %944 = vmatprep.subr.mxu0 0.0
    %945 = vmatpush1.msra.mxu0 0.0
    %946 = vmatprep.subr.mxu0 0.0
    %947 = vmatpush1.msra.mxu0 0.0
    %948 = vmatprep.subr.mxu0 0.0
    %949 = vmatpush1.msra.mxu0 0.0
    %950 = vmatprep.subr.mxu0 0.0
    %951 = vmatpush1.msra.mxu0 0.0
    %952 = vmatprep.subr.mxu0 0.0
    %953 = vmatpush1.msra.mxu0 0.0
    %954 = vmatprep.subr.mxu0 0.0
    %955 = vmatpush1.msra.mxu0 0.0
    %956 = vmatprep.subr.mxu0 0.0
    %957 = vmatpush1.msra.mxu0 0.0
    %958 = vmatprep.subr.mxu0 0.0
    %959 = vmatpush1.msra.mxu0 0.0
    %960 = vmatprep.subr.mxu0 0.0
    %961 = vmatpush1.msra.mxu0 0.0
    %962 = vmatprep.subr.mxu0 0.0
    %963 = vmatpush1.msra.mxu0 0.0
    %964 = vmatprep.subr.mxu0 0.0
    %965 = vmatpush1.msra.mxu0 0.0
    %966 = vmatprep.subr.mxu0 0.0
    %967 = vmatpush1.msra.mxu0 %v197
    %968 = vmatprep.subr.mxu0 0.0
    %969 = vmatpush1.msra.mxu0 %v196
    %970 = vmatprep.subr.mxu0 0.0
    %971 = vmatpush1.msra.mxu0 %v195
    %972 = vmatprep.subr.mxu0 0.0
    %973 = vmatpush1.msra.mxu0 %v194
    %974 = vmatprep.subr.mxu0 0.0
    %975 = vmatpush2.msra.mxu0 0.0
    %976 = vmatprep.subr.mxu0 0.0
    %977 = vmatpush2.msra.mxu0 0.0
    %978 = vmatprep.subr.mxu0 0.0
    %979 = vmatpush2.msra.mxu0 0.0
    %980 = vmatprep.subr.mxu0 0.0
    %981 = vmatpush2.msra.mxu0 0.0
    %982 = vmatprep.subr.mxu0 0.0
    %983 = vmatpush2.msra.mxu0 0.0
    %984 = vmatprep.subr.mxu0 0.0
    %985 = vmatpush2.msra.mxu0 0.0
    %986 = vmatprep.subr.mxu0 0.0
    %987 = vmatpush2.msra.mxu0 0.0
    %988 = vmatprep.subr.mxu0 0.0
    %989 = vmatpush2.msra.mxu0 0.0
    %990 = vmatprep.subr.mxu0 0.0
    %991 = vmatpush2.msra.mxu0 0.0
    %992 = vmatprep.subr.mxu0 0.0
    %993 = vmatpush2.msra.mxu0 0.0
    %994 = vmatprep.subr.mxu0 0.0
    %995 = vmatpush2.msra.mxu0 0.0
    %996 = vmatprep.subr.mxu0 0.0
    %997 = vmatpush2.msra.mxu0 0.0
    %998 = vmatprep.subr.mxu0 0.0
    %999 = vmatpush2.msra.mxu0 0.0
    %1000 = vmatprep.subr.mxu0 0.0
    %1001 = vmatpush2.msra.mxu0 0.0
    %1002 = vmatprep.subr.mxu0 0.0
    %1003 = vmatpush2.msra.mxu0 0.0
    %1004 = vmatprep.subr.mxu0 0.0
    %1005 = vmatpush2.msra.mxu0 0.0
    %1006 = vmatprep.mubr.f32.mxu0 0.0
    %1007 = vmatmul.mubr.f32.gmra.mxu0 %v940
    %v1008 = vpop.f32.mrf.mxu0
    %v1009 = vadd.f32 0.0, %v1008
    %v1010 = vpop.f32.mrf.mxu0
    %1011 = vdwg.mxu0
    %v1012 = vadd.f32 %v939, %v1009
    %v1013 = vxor.u32 %v1012, 2147483648
    %v1014 = vmul.f32 %v1013, 1.442695
    %v1015 = vpow.pop %v1014
    %v1016 = vadd.f32 %v1015, 1.0
    %v1017 = vrcp.pop %v1016
    %v1018 = vmul.f32 1.0, %v1017
    %v1019 = vtanh.pop %v1012
    %v1020 = vmul.f32 %v1018, %v925
    %1022 = vrot.lane.b32.xlu0 %v1019, 32
    %v1023 = vpop.permute.xlu0 %1022
    %v1025 = vmul.f32 %v1018, %v1023
    %1027 = vrot.lane.b32.xlu0 %v1025, 32
    %v1028 = vpop.permute.xlu0 %1027
    %v1030 = vadd.f32 %v1020, %v1028
    %v1031 = vtanh.pop %v1030
    %1033 = vrot.lane.b32.xlu0 %v1031, 32
    %v1034 = vpop.permute.xlu0 %1033
    %v1036 = vmul.f32 %v1018, %v1034
    %1038 = vrot.lane.b32.xlu0 %v1036, 64
    %v1039 = vpop.permute.xlu0 %1038
    %s1041 = scalar_lea.vmem %s6, 56
    %1042 = vst.msk [vmem:[%s1041] sm:$0xff] %vm56, %v1039
    %1043 = vst.msk [vmem:[#allocation2] sm:$0xff] %vm56, %v1039
    %1045 = vrot.lane.b32.xlu0 %v1030, 96
    %v1046 = vpop.permute.xlu0 %1045
    %1048 = vst.msk [vmem:[#allocation3] sm:$0xff] %vm56, %v1046
    // Predicated region
    $region30: #{lstm_model_forward.3} parent=1 // pred_check
      %p1049 = pneg %p28
    $region31: #{lstm_model_forward.3} parent=1 // pred_check_branch
      %1051 = sbr.rel (%p1049) target = $region33
    $region32: #{lstm_model_forward.3} parent=1 // pred_region
      %1052 = vst.msk [vmem:[#allocation5] sm:$0xff] %vm56, %v1039
      %1053 = vst.msk [vmem:[#allocation7] sm:$0xff] %vm56, %v1046
    $region33: #{lstm_model_forward.3} parent=1 // pred_fallthru
      _
    // Predicated region
    $region34: #{lstm_model_forward.3} parent=1 // pred_check
      _
    $region35: #{lstm_model_forward.3} parent=1 // pred_check_branch
      %1055 = sbr.rel (0) target = $region37
    $region36: #{lstm_model_forward.3} parent=1 // pred_region
      _
    $region37: #{lstm_model_forward.3} parent=1 // pred_fallthru
      _
    // Predicated region
    $region38: #{lstm_model_forward.3} parent=1 // pred_check
      _
    $region39: #{lstm_model_forward.3} parent=1 // pred_check_branch
      %1057 = sbr.rel (0) target = $region41
    $region40: #{lstm_model_forward.3} parent=1 // pred_region
      %s1059 = ssub.s32 128, 128
      %1060 = vsyncadd [#allocation6], %s1059
      %s1062 = sshll.u32 [#allocation5], 4
      %s1063 = int_to_ptr.vmem [resolvable:$true] %s1062
      %1065 = dma.vmem_to_hbm [thread:$0]  %s1063, 128, %s7, [#allocation6]
    $region41: #{lstm_model_forward.3} parent=1 // pred_fallthru
      _
    // Predicated region
    $region42: #{lstm_model_forward.3} parent=1 // pred_check
      _
    $region43: #{lstm_model_forward.3} parent=1 // pred_check_branch
      %1067 = sbr.rel (0) target = $region45
    $region44: #{lstm_model_forward.3} parent=1 // pred_region
      %s1069 = ssub.s32 128, 128
      %1070 = vsyncadd [#allocation8], %s1069
      %s1072 = sshll.u32 [#allocation7], 4
      %s1073 = int_to_ptr.vmem [resolvable:$true] %s1072
      %1075 = dma.vmem_to_hbm [thread:$0]  %s1073, 128, %s8, [#allocation8]
    $region45: #{lstm_model_forward.3} parent=1 // pred_fallthru
      _
    // Predicated region
    $region46: #{lstm_model_forward.3} parent=1 // pred_check
      _
    $region47: #{lstm_model_forward.3} parent=1 // pred_check_branch
      %1077 = sbr.rel (0) target = $region49
    $region48: #{lstm_model_forward.3} parent=1 // pred_region
      _
    $region49: #{lstm_model_forward.3} parent=1 // pred_fallthru
      _
    // Predicated region
    $region50: #{lstm_model_forward.3} parent=1 // pred_check
      _
    $region51: #{lstm_model_forward.3} parent=1 // pred_check_branch
      %1079 = sbr.rel (0) target = $region53
    $region52: #{lstm_model_forward.3} parent=1 // pred_region
      %1080 = dma.done [#allocation6], 128
    $region53: #{lstm_model_forward.3} parent=1 // pred_fallthru
      _
    // Predicated region
    $region54: #{lstm_model_forward.3} parent=1 // pred_check
      _
    $region55: #{lstm_model_forward.3} parent=1 // pred_check_branch
      %1082 = sbr.rel (0) target = $region57
    $region56: #{lstm_model_forward.3} parent=1 // pred_region
      %1083 = dma.done [#allocation8], 128
    $region57: #{lstm_model_forward.3} parent=1 // pred_fallthru
      _
    %1084 = vsyncpa [#allocation6], 1
    %1085 = vsyncpa [#allocation8], 1

</llo_original>
